<compile_context>
chip_gen: v5e
topology: v5e:2x2
jax: 0.10.0
libtpu: 0.0.40
codegen_flags: <defaults>
</compile_context>

<pallas_src>
import jax
import jax.numpy as jnp
import numpy as np
from jax import lax
from jax.experimental import pallas as pl
from jax.experimental.pallas import tpu as pltpu

# ---------------- small synthetic config (matches module semantics) ----------------
BATCH = 2
H = W = 4
P = H * W                 # spatial positions of the feature map
C_IN = 4                  # image channels
FEAT_DIM = 32             # stand-in for resnet feat_dim (2048)
WORD_DIM = 16             # stand-in for 300
D_DIM = 8                 # stand-in for d_dim=5
HID_DIM = 32              # stand-in for hid_dim=512
N_CLASS = 8
N_IMGNET = 16             # stand-in for 1000 ImageNet classes
T_MAX = 5
F_IN_HID = 32             # stand-in for F_in_layers='512'
F_REL_HID = 16            # stand-in for F_rel_layers='256'
F_OUT_HID = 32            # stand-in for F_out_layers='512'
GATE_PAD = 128            # each fused GRU gate block starts on a 128-lane boundary


# ---------------- fused per-batch-element forward kernel ----------------
def _forward_kernel(
        img_ref,
        wf_ref, bf_ref, wc_ref, bc_ref,
        wk_ref, bk_ref, emb_ref, wq_ref, bq_ref,
        wi1_ref, bi1_ref, wi2_ref, bi2_ref,
        a_ref, wg_ref, bg_ref,
        wo1_ref, bo1_ref, wo2_ref, bo2_ref,
        scores_ref, attn_ref, logits_ref):
    # --- backbone stand-in: per-pixel linear + ReLU ---
    x = img_ref[0]                                                          # (P, C_IN)
    f = jnp.maximum(
        jnp.dot(x, wf_ref[...], preferred_element_type=jnp.float32) + bf_ref[...], 0.0)  # (P, FEAT)

    # --- pooled ImageNet classifier: (1,P)@(P,FEAT) mean-pool on resident tile ---
    pooled = jnp.dot(jnp.full((1, P), 1.0 / P, dtype=jnp.float32), f,
                     preferred_element_type=jnp.float32)                    # (1, FEAT)
    cls = jnp.dot(pooled, wc_ref[...], preferred_element_type=jnp.float32) + bc_ref[...]
    cls = cls - jnp.max(cls, axis=-1, keepdims=True)
    ec = jnp.exp(cls)
    scores_ref[0] = ec * pl.reciprocal(jnp.sum(ec, axis=-1, keepdims=True), approx=True)

    # --- attention: keys / query, softmax over positions (lane axis), no transposes ---
    keys = jnp.dot(f, wk_ref[...], preferred_element_type=jnp.float32) + bk_ref[...]     # (P, HID)
    query = jnp.dot(emb_ref[...], wq_ref[...], preferred_element_type=jnp.float32) + bq_ref[...]  # (C, HID)
    s = lax.dot_general(query, keys, (((1,), (1,)), ((), ())),
                        preferred_element_type=jnp.float32)                 # (C, P)
    s = s - jnp.max(s, axis=-1, keepdims=True)
    es = jnp.exp(s)
    attn = es * pl.reciprocal(jnp.sum(es, axis=-1, keepdims=True), approx=True)
    attn_ref[0] = attn                                                      # (C, P)
    gi = jnp.dot(attn, f, preferred_element_type=jnp.float32)               # (C, FEAT)

    # --- F_in MLP -> h0 ---
    h = jnp.maximum(
        jnp.dot(gi, wi1_ref[...], preferred_element_type=jnp.float32) + bi1_ref[...], 0.0)
    h = jnp.dot(h, wi2_ref[...], preferred_element_type=jnp.float32) + bi2_ref[...]      # (C, D)

    # --- t_max graph propagation; single fused gate dot per GRU step ---
    A = a_ref[...]                                                          # (C, C)
    wg = wg_ref[...]                                                        # (2D, 4*GATE_PAD)
    bg = bg_ref[...]                                                        # (1,  4*GATE_PAD)
    for _ in range(T_MAX):                                                  # static unroll (t_max=5)
        msg = jnp.tanh(jnp.dot(A, h, preferred_element_type=jnp.float32))   # (C, D)
        gates = jnp.dot(jnp.concatenate([msg, h], axis=1), wg,
                        preferred_element_type=jnp.float32) + bg            # (C, 4*GATE_PAD)
        r = jax.nn.sigmoid(gates[:, 0:D_DIM])                               # 128-aligned slices
        z = jax.nn.sigmoid(gates[:, GATE_PAD:GATE_PAD + D_DIM])
        n = jnp.tanh(gates[:, 2 * GATE_PAD:2 * GATE_PAD + D_DIM]
                     + r * gates[:, 3 * GATE_PAD:3 * GATE_PAD + D_DIM])
        h = (1.0 - z) * n + z * h

    # --- F_out head ---
    hh = jnp.maximum(
        jnp.dot(h, wo1_ref[...], preferred_element_type=jnp.float32) + bo1_ref[...], 0.0)  # (C, F_OUT)
    logits_ref[0] = lax.dot_general(wo2_ref[...], hh, (((1,), (1,)), ((), ())),
                                    preferred_element_type=jnp.float32) + bo2_ref[0, 0]    # (1, C)


# ---------------- full forward (use_attn=True path) ----------------
@jax.jit
def forward(images, embed, edges, params):
    batch = images.shape[0]
    images3d = images.reshape(batch, P, C_IN)

    # F_rel edge MLP + tanh + sparse_coo_tensor(...).to_dense(): tiny, kept in JAX glue.
    embed_tuple = jnp.concatenate([embed[edges[0]], embed[edges[1]]], axis=1)
    hr = jnp.maximum(embed_tuple @ params["w_rel1"] + params["b_rel1"][0], 0.0)
    values = jnp.tanh((hr @ params["w_rel2"] + params["b_rel2"][0])[:, 0])
    prop_mat = jnp.zeros((N_CLASS, N_CLASS), jnp.float32).at[edges[0], edges[1]].add(values)

    # Fused GRU gate weight: [msg | h] @ W -> [r | z | gx_n | gh_n]; each gate block
    # padded to a 128-lane boundary so in-kernel slices are lane-tile aligned.
    D = D_DIM
    wi, wh, bi, bh = params["gru_wi"], params["gru_wh"], params["gru_bi"], params["gru_bh"]
    wg = jnp.zeros((2 * D, 4 * GATE_PAD), jnp.float32)
    wg = wg.at[0:D, 0:D].set(wi[0]).at[D:2 * D, 0:D].set(wh[0])
    wg = wg.at[0:D, GATE_PAD:GATE_PAD + D].set(wi[1]).at[D:2 * D, GATE_PAD:GATE_PAD + D].set(wh[1])
    wg = wg.at[0:D, 2 * GATE_PAD:2 * GATE_PAD + D].set(wi[2])
    wg = wg.at[D:2 * D, 3 * GATE_PAD:3 * GATE_PAD + D].set(wh[2])
    bg = jnp.zeros((1, 4 * GATE_PAD), jnp.float32)
    bg = bg.at[:, 0:D].set(bi[0] + bh[0])
    bg = bg.at[:, GATE_PAD:GATE_PAD + D].set(bi[1] + bh[1])
    bg = bg.at[:, 2 * GATE_PAD:2 * GATE_PAD + D].set(bi[2])
    bg = bg.at[:, 3 * GATE_PAD:3 * GATE_PAD + D].set(bh[2])

    w_out2_row = params["w_out2"].T                                          # (1, F_OUT_HID)

    vmem = pl.BlockSpec(memory_space=pltpu.MemorySpace.VMEM)   # whole-array VMEM residency (small weights)
    smem = pl.BlockSpec(memory_space=pltpu.MemorySpace.SMEM)   # (1,1) output bias scalar

    scores, attn, logits = pl.pallas_call(
        _forward_kernel,
        grid=(batch,),
        out_shape=(
            jax.ShapeDtypeStruct((batch, 1, N_IMGNET), jnp.float32),
            jax.ShapeDtypeStruct((batch, N_CLASS, P), jnp.float32),
            jax.ShapeDtypeStruct((batch, 1, N_CLASS), jnp.float32),
        ),
        in_specs=[pl.BlockSpec((1, P, C_IN), lambda b: (b, 0, 0))] + [vmem] * 19 + [smem],
        out_specs=(
            pl.BlockSpec((1, 1, N_IMGNET), lambda b: (b, 0, 0)),
            pl.BlockSpec((1, N_CLASS, P), lambda b: (b, 0, 0)),
            pl.BlockSpec((1, 1, N_CLASS), lambda b: (b, 0, 0)),
        ),
        compiler_params=pltpu.CompilerParams(
            dimension_semantics=("parallel",),
            vmem_limit_bytes=32 * 1024 * 1024),
    )(images3d,
      params["wf"], params["bf"], params["wc"], params["bc"],
      params["wk"], params["bk"], embed, params["wq"], params["bq"],
      params["w_in1"], params["b_in1"], params["w_in2"], params["b_in2"],
      prop_mat, wg, bg,
      params["w_out1"], params["b_out1"], w_out2_row, params["b_out2"])

    return {
        "logits": logits.reshape(batch, N_CLASS),                            # (batch, n_class)
        "attention": attn[..., None],                                        # (batch, n_class, P, 1)
        "imgnet_scores": scores.reshape(batch, N_IMGNET),                    # (batch, n_imgnet)
    }


# ---------------- pure-JAX reference (for correctness check) ----------------
def reference_forward(images, embed, edges, params):
    batch = images.shape[0]
    x = images.reshape(batch, P, C_IN)
    f = jnp.maximum(jnp.einsum("bpc,cf->bpf", x, params["wf"]) + params["bf"][0], 0.0)
    scores = jax.nn.softmax(jnp.mean(f, axis=1) @ params["wc"] + params["bc"][0], axis=1)
    keys = jnp.einsum("bpf,fh->bph", f, params["wk"]) + params["bk"][0]
    query = embed @ params["wq"] + params["bq"][0]
    attn = jax.nn.softmax(jnp.einsum("bph,ch->bcp", keys, query), axis=2)
    gi = jnp.einsum("bcp,bpf->bcf", attn, f)

    def mlp_ref(x_, w1, b1, w2, b2):
        return jnp.maximum(x_ @ w1 + b1[0], 0.0) @ w2 + b2[0]

    h0 = mlp_ref(gi.reshape(-1, FEAT_DIM), params["w_in1"], params["b_in1"],
                 params["w_in2"], params["b_in2"])
    et = jnp.concatenate([embed[edges[0]], embed[edges[1]]], axis=1)
    vals = jnp.tanh(mlp_ref(et, params["w_rel1"], params["b_rel1"],
                            params["w_rel2"], params["b_rel2"])[:, 0])
    A = jnp.zeros((N_CLASS, N_CLASS), jnp.float32).at[edges[0], edges[1]].add(vals)

    h = h0.reshape(batch, N_CLASS, D_DIM)
    wi, wh, bi, bh = params["gru_wi"], params["gru_wh"], params["gru_bi"], params["gru_bh"]
    for _ in range(T_MAX):
        msg = jnp.tanh(jnp.einsum("cd,bdk->bck", A, h))
        r = jax.nn.sigmoid(msg @ wi[0] + bi[0] + h @ wh[0] + bh[0])
        z = jax.nn.sigmoid(msg @ wi[1] + bi[1] + h @ wh[1] + bh[1])
        n = jnp.tanh(msg @ wi[2] + bi[2] + r * (h @ wh[2] + bh[2]))
        h = (1.0 - z) * n + z * h
    logits = mlp_ref(h.reshape(-1, D_DIM), params["w_out1"], params["b_out1"],
                     params["w_out2"], params["b_out2"]).reshape(batch, N_CLASS)
    return logits, attn, scores


# ---------------- deterministic parameter init ----------------
def init_params(key):
    ks = iter(jax.random.split(key, 24))

    def w(shape, scale=0.1):
        return jax.random.normal(next(ks), shape, jnp.float32) * scale

    return dict(
        wf=w((C_IN, FEAT_DIM)), bf=w((1, FEAT_DIM)),
        wc=w((FEAT_DIM, N_IMGNET)), bc=w((1, N_IMGNET)),
        wk=w((FEAT_DIM, HID_DIM)), bk=w((1, HID_DIM)),
        wq=w((WORD_DIM, HID_DIM)), bq=w((1, HID_DIM)),
        w_in1=w((FEAT_DIM, F_IN_HID)), b_in1=w((1, F_IN_HID)),
        w_in2=w((F_IN_HID, D_DIM)), b_in2=w((1, D_DIM)),
        w_rel1=w((2 * WORD_DIM, F_REL_HID)), b_rel1=w((1, F_REL_HID)),
        w_rel2=w((F_REL_HID, 1)), b_rel2=w((1, 1)),
        w_out1=w((D_DIM, F_OUT_HID)), b_out1=w((1, F_OUT_HID)),
        w_out2=w((F_OUT_HID, 1)), b_out2=w((1, 1)),
        gru_wi=w((3, D_DIM, D_DIM)), gru_wh=w((3, D_DIM, D_DIM)),
        gru_bi=w((3, 1, D_DIM)), gru_bh=w((3, 1, D_DIM)),
    )


if __name__ == "__main__":
    key = jax.random.PRNGKey(0)
    kp, ki, ke = jax.random.split(key, 3)
    params = init_params(kp)

    images = jax.random.normal(ki, (BATCH, H, W, C_IN), jnp.float32)        # NHWC
    embed = jax.random.normal(ke, (N_CLASS, WORD_DIM), jnp.float32)
    src = jnp.arange(N_CLASS, dtype=jnp.int32)
    edges = jnp.stack([jnp.concatenate([src, src]),
                       jnp.concatenate([(src + 1) % N_CLASS, (src + 2) % N_CLASS])]).astype(jnp.int32)

    out = forward(images, embed, edges, params)
    out = jax.tree_util.tree_map(jax.block_until_ready, out)

    ref_logits, ref_attn, ref_scores = reference_forward(images, embed, edges, params)
    np.testing.assert_allclose(np.asarray(out["logits"]), np.asarray(ref_logits), rtol=5e-3, atol=5e-3)
    np.testing.assert_allclose(np.asarray(out["attention"][..., 0]), np.asarray(ref_attn), rtol=5e-3, atol=5e-3)
    np.testing.assert_allclose(np.asarray(out["imgnet_scores"]), np.asarray(ref_scores), rtol=5e-3, atol=5e-3)

    print("KERNEL_OK")
</pallas_src>

<mosaic_0001>
module attributes {stable_mosaic.version = 11 : i64} {
  func.func @_forward_kernel(%arg0: i32, %arg1: memref<1x16x4xf32, #tpu.memory_space<vmem>>, %arg2: memref<4x32xf32, #tpu.memory_space<vmem>>, %arg3: memref<1x32xf32, #tpu.memory_space<vmem>>, %arg4: memref<32x16xf32, #tpu.memory_space<vmem>>, %arg5: memref<1x16xf32, #tpu.memory_space<vmem>>, %arg6: memref<32x32xf32, #tpu.memory_space<vmem>>, %arg7: memref<1x32xf32, #tpu.memory_space<vmem>>, %arg8: memref<8x16xf32, #tpu.memory_space<vmem>>, %arg9: memref<16x32xf32, #tpu.memory_space<vmem>>, %arg10: memref<1x32xf32, #tpu.memory_space<vmem>>, %arg11: memref<32x32xf32, #tpu.memory_space<vmem>>, %arg12: memref<1x32xf32, #tpu.memory_space<vmem>>, %arg13: memref<32x8xf32, #tpu.memory_space<vmem>>, %arg14: memref<1x8xf32, #tpu.memory_space<vmem>>, %arg15: memref<8x8xf32, #tpu.memory_space<vmem>>, %arg16: memref<16x512xf32, #tpu.memory_space<vmem>>, %arg17: memref<1x512xf32, #tpu.memory_space<vmem>>, %arg18: memref<8x32xf32, #tpu.memory_space<vmem>>, %arg19: memref<1x32xf32, #tpu.memory_space<vmem>>, %arg20: memref<1x32xf32, #tpu.memory_space<vmem>>, %arg21: memref<1x1xf32, #tpu.memory_space<smem>>, %arg22: memref<1x1x16xf32, #tpu.memory_space<vmem>>, %arg23: memref<1x8x16xf32, #tpu.memory_space<vmem>>, %arg24: memref<1x1x8xf32, #tpu.memory_space<vmem>>) attributes {dimension_semantics = [#tpu.dimension_semantics<parallel>], iteration_bounds = array<i64: 2>, scalar_prefetch = 0 : i64, scratch_operands = 0 : i64, tpu.core_type = #tpu.core_type<tc>, window_params = [{transform_indices = @transform_0, window_bounds = array<i64: 1, 16, 4>}, {pipeline_mode = #tpu.pipeline_mode<synchronous>, transform_indices = @transform_1, window_bounds = array<i64: 4, 32>}, {pipeline_mode = #tpu.pipeline_mode<synchronous>, transform_indices = @transform_2, window_bounds = array<i64: 1, 32>}, {pipeline_mode = #tpu.pipeline_mode<synchronous>, transform_indices = @transform_3, window_bounds = array<i64: 32, 16>}, {pipeline_mode = #tpu.pipeline_mode<synchronous>, transform_indices = @transform_4, window_bounds = array<i64: 1, 16>}, {pipeline_mode = #tpu.pipeline_mode<synchronous>, transform_indices = @transform_5, window_bounds = array<i64: 32, 32>}, {pipeline_mode = #tpu.pipeline_mode<synchronous>, transform_indices = @transform_6, window_bounds = array<i64: 1, 32>}, {pipeline_mode = #tpu.pipeline_mode<synchronous>, transform_indices = @transform_7, window_bounds = array<i64: 8, 16>}, {pipeline_mode = #tpu.pipeline_mode<synchronous>, transform_indices = @transform_8, window_bounds = array<i64: 16, 32>}, {pipeline_mode = #tpu.pipeline_mode<synchronous>, transform_indices = @transform_9, window_bounds = array<i64: 1, 32>}, {pipeline_mode = #tpu.pipeline_mode<synchronous>, transform_indices = @transform_10, window_bounds = array<i64: 32, 32>}, {pipeline_mode = #tpu.pipeline_mode<synchronous>, transform_indices = @transform_11, window_bounds = array<i64: 1, 32>}, {pipeline_mode = #tpu.pipeline_mode<synchronous>, transform_indices = @transform_12, window_bounds = array<i64: 32, 8>}, {pipeline_mode = #tpu.pipeline_mode<synchronous>, transform_indices = @transform_13, window_bounds = array<i64: 1, 8>}, {pipeline_mode = #tpu.pipeline_mode<synchronous>, transform_indices = @transform_14, window_bounds = array<i64: 8, 8>}, {pipeline_mode = #tpu.pipeline_mode<synchronous>, transform_indices = @transform_15, window_bounds = array<i64: 16, 512>}, {pipeline_mode = #tpu.pipeline_mode<synchronous>, transform_indices = @transform_16, window_bounds = array<i64: 1, 512>}, {pipeline_mode = #tpu.pipeline_mode<synchronous>, transform_indices = @transform_17, window_bounds = array<i64: 8, 32>}, {pipeline_mode = #tpu.pipeline_mode<synchronous>, transform_indices = @transform_18, window_bounds = array<i64: 1, 32>}, {pipeline_mode = #tpu.pipeline_mode<synchronous>, transform_indices = @transform_19, window_bounds = array<i64: 1, 32>}, {transform_indices = @transform_20, window_bounds = array<i64: 1, 1>}, {transform_indices = @transform_21, window_bounds = array<i64: 1, 1, 16>}, {transform_indices = @transform_22, window_bounds = array<i64: 1, 8, 16>}, {transform_indices = @transform_23, window_bounds = array<i64: 1, 1, 8>}]} {
    %c0 = arith.constant 0 : index
    %c0_0 = arith.constant 0 : index
    %c0_1 = arith.constant 0 : index
    %0 = vector.load %arg1[%c0, %c0_0, %c0_1] : memref<1x16x4xf32, #tpu.memory_space<vmem>>, vector<1x16x4xf32>
    %1 = vector.shape_cast %0 : vector<1x16x4xf32> to vector<16x4xf32>
    %c0_2 = arith.constant 0 : index
    %c0_3 = arith.constant 0 : index
    %2 = vector.load %arg2[%c0_2, %c0_3] : memref<4x32xf32, #tpu.memory_space<vmem>>, vector<4x32xf32>
    %cst = arith.constant dense<0.000000e+00> : vector<16x32xf32>
    %3 = tpu.matmul %1, %2, %cst {dimension_numbers = #tpu.dot_dimension_numbers<[1], [0], [0], [1], [0, 0, 1, 1], [], []>} : vector<16x4xf32>, vector<4x32xf32>, vector<16x32xf32> -> vector<16x32xf32>
    %c0_4 = arith.constant 0 : index
    %c0_5 = arith.constant 0 : index
    %4 = vector.load %arg3[%c0_4, %c0_5] : memref<1x32xf32, #tpu.memory_space<vmem>>, vector<1x32xf32>
    %5 = vector.broadcast %4 : vector<1x32xf32> to vector<16x32xf32>
    %6 = arith.addf %3, %5 : vector<16x32xf32>
    %cst_6 = arith.constant 0.000000e+00 : f32
    %7 = vector.broadcast %cst_6 : f32 to vector<16x32xf32>
    %8 = arith.maximumf %6, %7 : vector<16x32xf32>
    %cst_7 = arith.constant 6.250000e-02 : f32
    %9 = vector.broadcast %cst_7 : f32 to vector<1x16xf32>
    %cst_8 = arith.constant dense<0.000000e+00> : vector<1x32xf32>
    %10 = tpu.matmul %9, %8, %cst_8 {dimension_numbers = #tpu.dot_dimension_numbers<[1], [0], [0], [1], [0, 0, 1, 1], [], []>} : vector<1x16xf32>, vector<16x32xf32>, vector<1x32xf32> -> vector<1x32xf32>
    %c0_9 = arith.constant 0 : index
    %c0_10 = arith.constant 0 : index
    %11 = vector.load %arg4[%c0_9, %c0_10] : memref<32x16xf32, #tpu.memory_space<vmem>>, vector<32x16xf32>
    %cst_11 = arith.constant dense<0.000000e+00> : vector<1x16xf32>
    %12 = tpu.matmul %10, %11, %cst_11 {dimension_numbers = #tpu.dot_dimension_numbers<[1], [0], [0], [1], [0, 0, 1, 1], [], []>} : vector<1x32xf32>, vector<32x16xf32>, vector<1x16xf32> -> vector<1x16xf32>
    %c0_12 = arith.constant 0 : index
    %c0_13 = arith.constant 0 : index
    %13 = vector.load %arg5[%c0_12, %c0_13] : memref<1x16xf32, #tpu.memory_space<vmem>>, vector<1x16xf32>
    %14 = arith.addf %12, %13 : vector<1x16xf32>
    %cst_14 = arith.constant dense<0xFF800000> : vector<1xf32>
    %15 = vector.multi_reduction <maximumf>, %14, %cst_14 [1] : vector<1x16xf32> to vector<1xf32>
    %16 = vector.shape_cast %15 : vector<1xf32> to vector<1x1xf32>
    %17 = vector.broadcast %16 : vector<1x1xf32> to vector<1x16xf32>
    %18 = arith.subf %14, %17 : vector<1x16xf32>
    %19 = math.exp %18 : vector<1x16xf32>
    %cst_15 = arith.constant dense<0.000000e+00> : vector<1xf32>
    %20 = vector.multi_reduction <add>, %19, %cst_15 [1] : vector<1x16xf32> to vector<1xf32>
    %21 = vector.shape_cast %20 : vector<1xf32> to vector<1x1xf32>
    %22 = tpu.reciprocal %21 {approx = true} : vector<1x1xf32> -> vector<1x1xf32>
    %23 = vector.broadcast %22 : vector<1x1xf32> to vector<1x16xf32>
    %24 = arith.mulf %19, %23 : vector<1x16xf32>
    %c0_16 = arith.constant 0 : index
    %c0_17 = arith.constant 0 : index
    %c0_18 = arith.constant 0 : index
    %25 = vector.load %arg22[%c0_16, %c0_17, %c0_18] : memref<1x1x16xf32, #tpu.memory_space<vmem>>, vector<1x1x16xf32>
    %26 = vector.shape_cast %25 : vector<1x1x16xf32> to vector<1x16xf32>
    %27 = vector.shape_cast %24 : vector<1x16xf32> to vector<1x1x16xf32>
    tpu.vector_store %arg22[%c0_16, %c0_17, %c0_18], %27 {strides = array<i32>} : memref<1x1x16xf32, #tpu.memory_space<vmem>>, vector<1x1x16xf32>,
    %c0_19 = arith.constant 0 : index
    %c0_20 = arith.constant 0 : index
    %28 = vector.load %arg6[%c0_19, %c0_20] : memref<32x32xf32, #tpu.memory_space<vmem>>, vector<32x32xf32>
    %cst_21 = arith.constant dense<0.000000e+00> : vector<16x32xf32>
    %29 = tpu.matmul %8, %28, %cst_21 {dimension_numbers = #tpu.dot_dimension_numbers<[1], [0], [0], [1], [0, 0, 1, 1], [], []>} : vector<16x32xf32>, vector<32x32xf32>, vector<16x32xf32> -> vector<16x32xf32>
    %c0_22 = arith.constant 0 : index
    %c0_23 = arith.constant 0 : index
    %30 = vector.load %arg7[%c0_22, %c0_23] : memref<1x32xf32, #tpu.memory_space<vmem>>, vector<1x32xf32>
    %31 = vector.broadcast %30 : vector<1x32xf32> to vector<16x32xf32>
    %32 = arith.addf %29, %31 : vector<16x32xf32>
    %c0_24 = arith.constant 0 : index
    %c0_25 = arith.constant 0 : index
    %33 = vector.load %arg8[%c0_24, %c0_25] : memref<8x16xf32, #tpu.memory_space<vmem>>, vector<8x16xf32>
    %c0_26 = arith.constant 0 : index
    %c0_27 = arith.constant 0 : index
    %34 = vector.load %arg9[%c0_26, %c0_27] : memref<16x32xf32, #tpu.memory_space<vmem>>, vector<16x32xf32>
    %cst_28 = arith.constant dense<0.000000e+00> : vector<8x32xf32>
    %35 = tpu.matmul %33, %34, %cst_28 {dimension_numbers = #tpu.dot_dimension_numbers<[1], [0], [0], [1], [0, 0, 1, 1], [], []>} : vector<8x16xf32>, vector<16x32xf32>, vector<8x32xf32> -> vector<8x32xf32>
    %c0_29 = arith.constant 0 : index
    %c0_30 = arith.constant 0 : index
    %36 = vector.load %arg10[%c0_29, %c0_30] : memref<1x32xf32, #tpu.memory_space<vmem>>, vector<1x32xf32>
    %37 = vector.broadcast %36 : vector<1x32xf32> to vector<8x32xf32>
    %38 = arith.addf %35, %37 : vector<8x32xf32>
    %cst_31 = arith.constant dense<0.000000e+00> : vector<8x16xf32>
    %39 = tpu.matmul %38, %32, %cst_31 {dimension_numbers = #tpu.dot_dimension_numbers<[1], [1], [0], [0], [0, 0, 1, 0], [], []>} : vector<8x32xf32>, vector<16x32xf32>, vector<8x16xf32> -> vector<8x16xf32>
    %cst_32 = arith.constant dense<0xFF800000> : vector<8xf32>
    %40 = vector.multi_reduction <maximumf>, %39, %cst_32 [1] : vector<8x16xf32> to vector<8xf32>
    %41 = vector.shape_cast %40 : vector<8xf32> to vector<8x1xf32>
    %42 = vector.broadcast %41 : vector<8x1xf32> to vector<8x16xf32>
    %43 = arith.subf %39, %42 : vector<8x16xf32>
    %44 = math.exp %43 : vector<8x16xf32>
    %cst_33 = arith.constant dense<0.000000e+00> : vector<8xf32>
    %45 = vector.multi_reduction <add>, %44, %cst_33 [1] : vector<8x16xf32> to vector<8xf32>
    %46 = vector.shape_cast %45 : vector<8xf32> to vector<8x1xf32>
    %47 = tpu.reciprocal %46 {approx = true} : vector<8x1xf32> -> vector<8x1xf32>
    %48 = vector.broadcast %47 : vector<8x1xf32> to vector<8x16xf32>
    %49 = arith.mulf %44, %48 : vector<8x16xf32>
    %c0_34 = arith.constant 0 : index
    %c0_35 = arith.constant 0 : index
    %c0_36 = arith.constant 0 : index
    %50 = vector.load %arg23[%c0_34, %c0_35, %c0_36] : memref<1x8x16xf32, #tpu.memory_space<vmem>>, vector<1x8x16xf32>
    %51 = vector.shape_cast %50 : vector<1x8x16xf32> to vector<8x16xf32>
    %52 = vector.shape_cast %49 : vector<8x16xf32> to vector<1x8x16xf32>
    tpu.vector_store %arg23[%c0_34, %c0_35, %c0_36], %52 {strides = array<i32>} : memref<1x8x16xf32, #tpu.memory_space<vmem>>, vector<1x8x16xf32>,
    %cst_37 = arith.constant dense<0.000000e+00> : vector<8x32xf32>
    %53 = tpu.matmul %49, %8, %cst_37 {dimension_numbers = #tpu.dot_dimension_numbers<[1], [0], [0], [1], [0, 0, 1, 1], [], []>} : vector<8x16xf32>, vector<16x32xf32>, vector<8x32xf32> -> vector<8x32xf32>
    %c0_38 = arith.constant 0 : index
    %c0_39 = arith.constant 0 : index
    %54 = vector.load %arg11[%c0_38, %c0_39] : memref<32x32xf32, #tpu.memory_space<vmem>>, vector<32x32xf32>
    %cst_40 = arith.constant dense<0.000000e+00> : vector<8x32xf32>
    %55 = tpu.matmul %53, %54, %cst_40 {dimension_numbers = #tpu.dot_dimension_numbers<[1], [0], [0], [1], [0, 0, 1, 1], [], []>} : vector<8x32xf32>, vector<32x32xf32>, vector<8x32xf32> -> vector<8x32xf32>
    %c0_41 = arith.constant 0 : index
    %c0_42 = arith.constant 0 : index
    %56 = vector.load %arg12[%c0_41, %c0_42] : memref<1x32xf32, #tpu.memory_space<vmem>>, vector<1x32xf32>
    %57 = vector.broadcast %56 : vector<1x32xf32> to vector<8x32xf32>
    %58 = arith.addf %55, %57 : vector<8x32xf32>
    %cst_43 = arith.constant 0.000000e+00 : f32
    %59 = vector.broadcast %cst_43 : f32 to vector<8x32xf32>
    %60 = arith.maximumf %58, %59 : vector<8x32xf32>
    %c0_44 = arith.constant 0 : index
    %c0_45 = arith.constant 0 : index
    %61 = vector.load %arg13[%c0_44, %c0_45] : memref<32x8xf32, #tpu.memory_space<vmem>>, vector<32x8xf32>
    %cst_46 = arith.constant dense<0.000000e+00> : vector<8x8xf32>
    %62 = tpu.matmul %60, %61, %cst_46 {dimension_numbers = #tpu.dot_dimension_numbers<[1], [0], [0], [1], [0, 0, 1, 1], [], []>} : vector<8x32xf32>, vector<32x8xf32>, vector<8x8xf32> -> vector<8x8xf32>
    %c0_47 = arith.constant 0 : index
    %c0_48 = arith.constant 0 : index
    %63 = vector.load %arg14[%c0_47, %c0_48] : memref<1x8xf32, #tpu.memory_space<vmem>>, vector<1x8xf32>
    %64 = vector.broadcast %63 : vector<1x8xf32> to vector<8x8xf32>
    %65 = arith.addf %62, %64 : vector<8x8xf32>
    %c0_49 = arith.constant 0 : index
    %c0_50 = arith.constant 0 : index
    %66 = vector.load %arg15[%c0_49, %c0_50] : memref<8x8xf32, #tpu.memory_space<vmem>>, vector<8x8xf32>
    %c0_51 = arith.constant 0 : index
    %c0_52 = arith.constant 0 : index
    %67 = vector.load %arg16[%c0_51, %c0_52] : memref<16x512xf32, #tpu.memory_space<vmem>>, vector<16x512xf32>
    %c0_53 = arith.constant 0 : index
    %c0_54 = arith.constant 0 : index
    %68 = vector.load %arg17[%c0_53, %c0_54] : memref<1x512xf32, #tpu.memory_space<vmem>>, vector<1x512xf32>
    %cst_55 = arith.constant dense<0.000000e+00> : vector<8x8xf32>
    %69 = tpu.matmul %66, %65, %cst_55 {dimension_numbers = #tpu.dot_dimension_numbers<[1], [0], [0], [1], [0, 0, 1, 1], [], []>} : vector<8x8xf32>, vector<8x8xf32>, vector<8x8xf32> -> vector<8x8xf32>
    %70 = math.tanh %69 : vector<8x8xf32>
    %71 = tpu.concatenate %70, %65 in 1 : vector<8x8xf32>, vector<8x8xf32> -> vector<8x16xf32>
    %cst_56 = arith.constant dense<0.000000e+00> : vector<8x512xf32>
    %72 = tpu.matmul %71, %67, %cst_56 {dimension_numbers = #tpu.dot_dimension_numbers<[1], [0], [0], [1], [0, 0, 1, 1], [], []>} : vector<8x16xf32>, vector<16x512xf32>, vector<8x512xf32> -> vector<8x512xf32>
    %73 = vector.broadcast %68 : vector<1x512xf32> to vector<8x512xf32>
    %74 = arith.addf %72, %73 : vector<8x512xf32>
    %75 = vector.extract_strided_slice %74 {offsets = [0, 0], sizes = [8, 8], strides = [1, 1]} : vector<8x512xf32> to vector<8x8xf32>
    %76 = arith.negf %75 : vector<8x8xf32>
    %77 = math.exp %76 : vector<8x8xf32>
    %cst_57 = arith.constant 1.000000e+00 : f32
    %78 = vector.broadcast %cst_57 : f32 to vector<8x8xf32>
    %79 = arith.addf %78, %77 : vector<8x8xf32>
    %80 = arith.divf %78, %79 : vector<8x8xf32>
    %81 = vector.extract_strided_slice %74 {offsets = [0, 128], sizes = [8, 8], strides = [1, 1]} : vector<8x512xf32> to vector<8x8xf32>
    %82 = arith.negf %81 : vector<8x8xf32>
    %83 = math.exp %82 : vector<8x8xf32>
    %cst_58 = arith.constant 1.000000e+00 : f32
    %84 = vector.broadcast %cst_58 : f32 to vector<8x8xf32>
    %85 = arith.addf %84, %83 : vector<8x8xf32>
    %86 = arith.divf %84, %85 : vector<8x8xf32>
    %87 = vector.extract_strided_slice %74 {offsets = [0, 256], sizes = [8, 8], strides = [1, 1]} : vector<8x512xf32> to vector<8x8xf32>
    %88 = vector.extract_strided_slice %74 {offsets = [0, 384], sizes = [8, 8], strides = [1, 1]} : vector<8x512xf32> to vector<8x8xf32>
    %89 = arith.mulf %80, %88 : vector<8x8xf32>
    %90 = arith.addf %87, %89 : vector<8x8xf32>
    %91 = math.tanh %90 : vector<8x8xf32>
    %cst_59 = arith.constant 1.000000e+00 : f32
    %92 = vector.broadcast %cst_59 : f32 to vector<8x8xf32>
    %93 = arith.subf %92, %86 : vector<8x8xf32>
    %94 = arith.mulf %93, %91 : vector<8x8xf32>
    %95 = arith.mulf %86, %65 : vector<8x8xf32>
    %96 = arith.addf %94, %95 : vector<8x8xf32>
    %cst_60 = arith.constant dense<0.000000e+00> : vector<8x8xf32>
    %97 = tpu.matmul %66, %96, %cst_60 {dimension_numbers = #tpu.dot_dimension_numbers<[1], [0], [0], [1], [0, 0, 1, 1], [], []>} : vector<8x8xf32>, vector<8x8xf32>, vector<8x8xf32> -> vector<8x8xf32>
    %98 = math.tanh %97 : vector<8x8xf32>
    %99 = tpu.concatenate %98, %96 in 1 : vector<8x8xf32>, vector<8x8xf32> -> vector<8x16xf32>
    %cst_61 = arith.constant dense<0.000000e+00> : vector<8x512xf32>
    %100 = tpu.matmul %99, %67, %cst_61 {dimension_numbers = #tpu.dot_dimension_numbers<[1], [0], [0], [1], [0, 0, 1, 1], [], []>} : vector<8x16xf32>, vector<16x512xf32>, vector<8x512xf32> -> vector<8x512xf32>
    %101 = vector.broadcast %68 : vector<1x512xf32> to vector<8x512xf32>
    %102 = arith.addf %100, %101 : vector<8x512xf32>
    %103 = vector.extract_strided_slice %102 {offsets = [0, 0], sizes = [8, 8], strides = [1, 1]} : vector<8x512xf32> to vector<8x8xf32>
    %104 = arith.negf %103 : vector<8x8xf32>
    %105 = math.exp %104 : vector<8x8xf32>
    %cst_62 = arith.constant 1.000000e+00 : f32
    %106 = vector.broadcast %cst_62 : f32 to vector<8x8xf32>
    %107 = arith.addf %106, %105 : vector<8x8xf32>
    %108 = arith.divf %106, %107 : vector<8x8xf32>
    %109 = vector.extract_strided_slice %102 {offsets = [0, 128], sizes = [8, 8], strides = [1, 1]} : vector<8x512xf32> to vector<8x8xf32>
    %110 = arith.negf %109 : vector<8x8xf32>
    %111 = math.exp %110 : vector<8x8xf32>
    %cst_63 = arith.constant 1.000000e+00 : f32
    %112 = vector.broadcast %cst_63 : f32 to vector<8x8xf32>
    %113 = arith.addf %112, %111 : vector<8x8xf32>
    %114 = arith.divf %112, %113 : vector<8x8xf32>
    %115 = vector.extract_strided_slice %102 {offsets = [0, 256], sizes = [8, 8], strides = [1, 1]} : vector<8x512xf32> to vector<8x8xf32>
    %116 = vector.extract_strided_slice %102 {offsets = [0, 384], sizes = [8, 8], strides = [1, 1]} : vector<8x512xf32> to vector<8x8xf32>
    %117 = arith.mulf %108, %116 : vector<8x8xf32>
    %118 = arith.addf %115, %117 : vector<8x8xf32>
    %119 = math.tanh %118 : vector<8x8xf32>
    %cst_64 = arith.constant 1.000000e+00 : f32
    %120 = vector.broadcast %cst_64 : f32 to vector<8x8xf32>
    %121 = arith.subf %120, %114 : vector<8x8xf32>
    %122 = arith.mulf %121, %119 : vector<8x8xf32>
    %123 = arith.mulf %114, %96 : vector<8x8xf32>
    %124 = arith.addf %122, %123 : vector<8x8xf32>
    %cst_65 = arith.constant dense<0.000000e+00> : vector<8x8xf32>
    %125 = tpu.matmul %66, %124, %cst_65 {dimension_numbers = #tpu.dot_dimension_numbers<[1], [0], [0], [1], [0, 0, 1, 1], [], []>} : vector<8x8xf32>, vector<8x8xf32>, vector<8x8xf32> -> vector<8x8xf32>
    %126 = math.tanh %125 : vector<8x8xf32>
    %127 = tpu.concatenate %126, %124 in 1 : vector<8x8xf32>, vector<8x8xf32> -> vector<8x16xf32>
    %cst_66 = arith.constant dense<0.000000e+00> : vector<8x512xf32>
    %128 = tpu.matmul %127, %67, %cst_66 {dimension_numbers = #tpu.dot_dimension_numbers<[1], [0], [0], [1], [0, 0, 1, 1], [], []>} : vector<8x16xf32>, vector<16x512xf32>, vector<8x512xf32> -> vector<8x512xf32>
    %129 = vector.broadcast %68 : vector<1x512xf32> to vector<8x512xf32>
    %130 = arith.addf %128, %129 : vector<8x512xf32>
    %131 = vector.extract_strided_slice %130 {offsets = [0, 0], sizes = [8, 8], strides = [1, 1]} : vector<8x512xf32> to vector<8x8xf32>
    %132 = arith.negf %131 : vector<8x8xf32>
    %133 = math.exp %132 : vector<8x8xf32>
    %cst_67 = arith.constant 1.000000e+00 : f32
    %134 = vector.broadcast %cst_67 : f32 to vector<8x8xf32>
    %135 = arith.addf %134, %133 : vector<8x8xf32>
    %136 = arith.divf %134, %135 : vector<8x8xf32>
    %137 = vector.extract_strided_slice %130 {offsets = [0, 128], sizes = [8, 8], strides = [1, 1]} : vector<8x512xf32> to vector<8x8xf32>
    %138 = arith.negf %137 : vector<8x8xf32>
    %139 = math.exp %138 : vector<8x8xf32>
    %cst_68 = arith.constant 1.000000e+00 : f32
    %140 = vector.broadcast %cst_68 : f32 to vector<8x8xf32>
    %141 = arith.addf %140, %139 : vector<8x8xf32>
    %142 = arith.divf %140, %141 : vector<8x8xf32>
    %143 = vector.extract_strided_slice %130 {offsets = [0, 256], sizes = [8, 8], strides = [1, 1]} : vector<8x512xf32> to vector<8x8xf32>
    %144 = vector.extract_strided_slice %130 {offsets = [0, 384], sizes = [8, 8], strides = [1, 1]} : vector<8x512xf32> to vector<8x8xf32>
    %145 = arith.mulf %136, %144 : vector<8x8xf32>
    %146 = arith.addf %143, %145 : vector<8x8xf32>
    %147 = math.tanh %146 : vector<8x8xf32>
    %cst_69 = arith.constant 1.000000e+00 : f32
    %148 = vector.broadcast %cst_69 : f32 to vector<8x8xf32>
    %149 = arith.subf %148, %142 : vector<8x8xf32>
    %150 = arith.mulf %149, %147 : vector<8x8xf32>
    %151 = arith.mulf %142, %124 : vector<8x8xf32>
    %152 = arith.addf %150, %151 : vector<8x8xf32>
    %cst_70 = arith.constant dense<0.000000e+00> : vector<8x8xf32>
    %153 = tpu.matmul %66, %152, %cst_70 {dimension_numbers = #tpu.dot_dimension_numbers<[1], [0], [0], [1], [0, 0, 1, 1], [], []>} : vector<8x8xf32>, vector<8x8xf32>, vector<8x8xf32> -> vector<8x8xf32>
    %154 = math.tanh %153 : vector<8x8xf32>
    %155 = tpu.concatenate %154, %152 in 1 : vector<8x8xf32>, vector<8x8xf32> -> vector<8x16xf32>
    %cst_71 = arith.constant dense<0.000000e+00> : vector<8x512xf32>
    %156 = tpu.matmul %155, %67, %cst_71 {dimension_numbers = #tpu.dot_dimension_numbers<[1], [0], [0], [1], [0, 0, 1, 1], [], []>} : vector<8x16xf32>, vector<16x512xf32>, vector<8x512xf32> -> vector<8x512xf32>
    %157 = vector.broadcast %68 : vector<1x512xf32> to vector<8x512xf32>
    %158 = arith.addf %156, %157 : vector<8x512xf32>
    %159 = vector.extract_strided_slice %158 {offsets = [0, 0], sizes = [8, 8], strides = [1, 1]} : vector<8x512xf32> to vector<8x8xf32>
    %160 = arith.negf %159 : vector<8x8xf32>
    %161 = math.exp %160 : vector<8x8xf32>
    %cst_72 = arith.constant 1.000000e+00 : f32
    %162 = vector.broadcast %cst_72 : f32 to vector<8x8xf32>
    %163 = arith.addf %162, %161 : vector<8x8xf32>
    %164 = arith.divf %162, %163 : vector<8x8xf32>
    %165 = vector.extract_strided_slice %158 {offsets = [0, 128], sizes = [8, 8], strides = [1, 1]} : vector<8x512xf32> to vector<8x8xf32>
    %166 = arith.negf %165 : vector<8x8xf32>
    %167 = math.exp %166 : vector<8x8xf32>
    %cst_73 = arith.constant 1.000000e+00 : f32
    %168 = vector.broadcast %cst_73 : f32 to vector<8x8xf32>
    %169 = arith.addf %168, %167 : vector<8x8xf32>
    %170 = arith.divf %168, %169 : vector<8x8xf32>
    %171 = vector.extract_strided_slice %158 {offsets = [0, 256], sizes = [8, 8], strides = [1, 1]} : vector<8x512xf32> to vector<8x8xf32>
    %172 = vector.extract_strided_slice %158 {offsets = [0, 384], sizes = [8, 8], strides = [1, 1]} : vector<8x512xf32> to vector<8x8xf32>
    %173 = arith.mulf %164, %172 : vector<8x8xf32>
    %174 = arith.addf %171, %173 : vector<8x8xf32>
    %175 = math.tanh %174 : vector<8x8xf32>
    %cst_74 = arith.constant 1.000000e+00 : f32
    %176 = vector.broadcast %cst_74 : f32 to vector<8x8xf32>
    %177 = arith.subf %176, %170 : vector<8x8xf32>
    %178 = arith.mulf %177, %175 : vector<8x8xf32>
    %179 = arith.mulf %170, %152 : vector<8x8xf32>
    %180 = arith.addf %178, %179 : vector<8x8xf32>
    %cst_75 = arith.constant dense<0.000000e+00> : vector<8x8xf32>
    %181 = tpu.matmul %66, %180, %cst_75 {dimension_numbers = #tpu.dot_dimension_numbers<[1], [0], [0], [1], [0, 0, 1, 1], [], []>} : vector<8x8xf32>, vector<8x8xf32>, vector<8x8xf32> -> vector<8x8xf32>
    %182 = math.tanh %181 : vector<8x8xf32>
    %183 = tpu.concatenate %182, %180 in 1 : vector<8x8xf32>, vector<8x8xf32> -> vector<8x16xf32>
    %cst_76 = arith.constant dense<0.000000e+00> : vector<8x512xf32>
    %184 = tpu.matmul %183, %67, %cst_76 {dimension_numbers = #tpu.dot_dimension_numbers<[1], [0], [0], [1], [0, 0, 1, 1], [], []>} : vector<8x16xf32>, vector<16x512xf32>, vector<8x512xf32> -> vector<8x512xf32>
    %185 = vector.broadcast %68 : vector<1x512xf32> to vector<8x512xf32>
    %186 = arith.addf %184, %185 : vector<8x512xf32>
    %187 = vector.extract_strided_slice %186 {offsets = [0, 0], sizes = [8, 8], strides = [1, 1]} : vector<8x512xf32> to vector<8x8xf32>
    %188 = arith.negf %187 : vector<8x8xf32>
    %189 = math.exp %188 : vector<8x8xf32>
    %cst_77 = arith.constant 1.000000e+00 : f32
    %190 = vector.broadcast %cst_77 : f32 to vector<8x8xf32>
    %191 = arith.addf %190, %189 : vector<8x8xf32>
    %192 = arith.divf %190, %191 : vector<8x8xf32>
    %193 = vector.extract_strided_slice %186 {offsets = [0, 128], sizes = [8, 8], strides = [1, 1]} : vector<8x512xf32> to vector<8x8xf32>
    %194 = arith.negf %193 : vector<8x8xf32>
    %195 = math.exp %194 : vector<8x8xf32>
    %cst_78 = arith.constant 1.000000e+00 : f32
    %196 = vector.broadcast %cst_78 : f32 to vector<8x8xf32>
    %197 = arith.addf %196, %195 : vector<8x8xf32>
    %198 = arith.divf %196, %197 : vector<8x8xf32>
    %199 = vector.extract_strided_slice %186 {offsets = [0, 256], sizes = [8, 8], strides = [1, 1]} : vector<8x512xf32> to vector<8x8xf32>
    %200 = vector.extract_strided_slice %186 {offsets = [0, 384], sizes = [8, 8], strides = [1, 1]} : vector<8x512xf32> to vector<8x8xf32>
    %201 = arith.mulf %192, %200 : vector<8x8xf32>
    %202 = arith.addf %199, %201 : vector<8x8xf32>
    %203 = math.tanh %202 : vector<8x8xf32>
    %cst_79 = arith.constant 1.000000e+00 : f32
    %204 = vector.broadcast %cst_79 : f32 to vector<8x8xf32>
    %205 = arith.subf %204, %198 : vector<8x8xf32>
    %206 = arith.mulf %205, %203 : vector<8x8xf32>
    %207 = arith.mulf %198, %180 : vector<8x8xf32>
    %208 = arith.addf %206, %207 : vector<8x8xf32>
    %c0_80 = arith.constant 0 : index
    %c0_81 = arith.constant 0 : index
    %209 = vector.load %arg18[%c0_80, %c0_81] : memref<8x32xf32, #tpu.memory_space<vmem>>, vector<8x32xf32>
    %cst_82 = arith.constant dense<0.000000e+00> : vector<8x32xf32>
    %210 = tpu.matmul %208, %209, %cst_82 {dimension_numbers = #tpu.dot_dimension_numbers<[1], [0], [0], [1], [0, 0, 1, 1], [], []>} : vector<8x8xf32>, vector<8x32xf32>, vector<8x32xf32> -> vector<8x32xf32>
    %c0_83 = arith.constant 0 : index
    %c0_84 = arith.constant 0 : index
    %211 = vector.load %arg19[%c0_83, %c0_84] : memref<1x32xf32, #tpu.memory_space<vmem>>, vector<1x32xf32>
    %212 = vector.broadcast %211 : vector<1x32xf32> to vector<8x32xf32>
    %213 = arith.addf %210, %212 : vector<8x32xf32>
    %cst_85 = arith.constant 0.000000e+00 : f32
    %214 = vector.broadcast %cst_85 : f32 to vector<8x32xf32>
    %215 = arith.maximumf %213, %214 : vector<8x32xf32>
    %c0_86 = arith.constant 0 : index
    %c0_87 = arith.constant 0 : index
    %216 = vector.load %arg20[%c0_86, %c0_87] : memref<1x32xf32, #tpu.memory_space<vmem>>, vector<1x32xf32>
    %cst_88 = arith.constant dense<0.000000e+00> : vector<1x8xf32>
    %217 = tpu.matmul %216, %215, %cst_88 {dimension_numbers = #tpu.dot_dimension_numbers<[1], [1], [0], [0], [0, 0, 1, 0], [], []>} : vector<1x32xf32>, vector<8x32xf32>, vector<1x8xf32> -> vector<1x8xf32>
    %c0_89 = arith.constant 0 : index
    %c0_90 = arith.constant 0 : index
    %218 = memref.load %arg21[%c0_89, %c0_90] : memref<1x1xf32, #tpu.memory_space<smem>>
    %219 = vector.broadcast %218 : f32 to vector<1x8xf32>
    %220 = arith.addf %217, %219 : vector<1x8xf32>
    %c0_91 = arith.constant 0 : index
    %c0_92 = arith.constant 0 : index
    %c0_93 = arith.constant 0 : index
    %221 = vector.load %arg24[%c0_91, %c0_92, %c0_93] : memref<1x1x8xf32, #tpu.memory_space<vmem>>, vector<1x1x8xf32>
    %222 = vector.shape_cast %221 : vector<1x1x8xf32> to vector<1x8xf32>
    %223 = vector.shape_cast %220 : vector<1x8xf32> to vector<1x1x8xf32>
    tpu.vector_store %arg24[%c0_91, %c0_92, %c0_93], %223 {strides = array<i32>} : memref<1x1x8xf32, #tpu.memory_space<vmem>>, vector<1x1x8xf32>,
    return
  }
  func.func @transform_0(%arg0: i32) -> (i32, i32, i32) {
    %c0_i32 = arith.constant 0 : i32
    %c0_i32_0 = arith.constant 0 : i32
    %c0_i32_1 = arith.constant 0 : i32
    return %arg0, %c0_i32, %c0_i32_0 : i32, i32, i32
  }
  func.func @transform_1(%arg0: i32) -> (i32, i32) {
    %c0_i32 = arith.constant 0 : i32
    %c0_i32_0 = arith.constant 0 : i32
    %c0_i32_1 = arith.constant 0 : i32
    return %c0_i32, %c0_i32_0 : i32, i32
  }
  func.func @transform_2(%arg0: i32) -> (i32, i32) {
    %c0_i32 = arith.constant 0 : i32
    %c0_i32_0 = arith.constant 0 : i32
    %c0_i32_1 = arith.constant 0 : i32
    return %c0_i32, %c0_i32_0 : i32, i32
  }
  func.func @transform_3(%arg0: i32) -> (i32, i32) {
    %c0_i32 = arith.constant 0 : i32
    %c0_i32_0 = arith.constant 0 : i32
    %c0_i32_1 = arith.constant 0 : i32
    return %c0_i32, %c0_i32_0 : i32, i32
  }
  func.func @transform_4(%arg0: i32) -> (i32, i32) {
    %c0_i32 = arith.constant 0 : i32
    %c0_i32_0 = arith.constant 0 : i32
    %c0_i32_1 = arith.constant 0 : i32
    return %c0_i32, %c0_i32_0 : i32, i32
  }
  func.func @transform_5(%arg0: i32) -> (i32, i32) {
    %c0_i32 = arith.constant 0 : i32
    %c0_i32_0 = arith.constant 0 : i32
    %c0_i32_1 = arith.constant 0 : i32
    return %c0_i32, %c0_i32_0 : i32, i32
  }
  func.func @transform_6(%arg0: i32) -> (i32, i32) {
    %c0_i32 = arith.constant 0 : i32
    %c0_i32_0 = arith.constant 0 : i32
    %c0_i32_1 = arith.constant 0 : i32
    return %c0_i32, %c0_i32_0 : i32, i32
  }
  func.func @transform_7(%arg0: i32) -> (i32, i32) {
    %c0_i32 = arith.constant 0 : i32
    %c0_i32_0 = arith.constant 0 : i32
    %c0_i32_1 = arith.constant 0 : i32
    return %c0_i32, %c0_i32_0 : i32, i32
  }
  func.func @transform_8(%arg0: i32) -> (i32, i32) {
    %c0_i32 = arith.constant 0 : i32
    %c0_i32_0 = arith.constant 0 : i32
    %c0_i32_1 = arith.constant 0 : i32
    return %c0_i32, %c0_i32_0 : i32, i32
  }
  func.func @transform_9(%arg0: i32) -> (i32, i32) {
    %c0_i32 = arith.constant 0 : i32
    %c0_i32_0 = arith.constant 0 : i32
    %c0_i32_1 = arith.constant 0 : i32
    return %c0_i32, %c0_i32_0 : i32, i32
  }
  func.func @transform_10(%arg0: i32) -> (i32, i32) {
    %c0_i32 = arith.constant 0 : i32
    %c0_i32_0 = arith.constant 0 : i32
    %c0_i32_1 = arith.constant 0 : i32
    return %c0_i32, %c0_i32_0 : i32, i32
  }
  func.func @transform_11(%arg0: i32) -> (i32, i32) {
    %c0_i32 = arith.constant 0 : i32
    %c0_i32_0 = arith.constant 0 : i32
    %c0_i32_1 = arith.constant 0 : i32
    return %c0_i32, %c0_i32_0 : i32, i32
  }
  func.func @transform_12(%arg0: i32) -> (i32, i32) {
    %c0_i32 = arith.constant 0 : i32
    %c0_i32_0 = arith.constant 0 : i32
    %c0_i32_1 = arith.constant 0 : i32
    return %c0_i32, %c0_i32_0 : i32, i32
  }
  func.func @transform_13(%arg0: i32) -> (i32, i32) {
    %c0_i32 = arith.constant 0 : i32
    %c0_i32_0 = arith.constant 0 : i32
    %c0_i32_1 = arith.constant 0 : i32
    return %c0_i32, %c0_i32_0 : i32, i32
  }
  func.func @transform_14(%arg0: i32) -> (i32, i32) {
    %c0_i32 = arith.constant 0 : i32
    %c0_i32_0 = arith.constant 0 : i32
    %c0_i32_1 = arith.constant 0 : i32
    return %c0_i32, %c0_i32_0 : i32, i32
  }
  func.func @transform_15(%arg0: i32) -> (i32, i32) {
    %c0_i32 = arith.constant 0 : i32
    %c0_i32_0 = arith.constant 0 : i32
    %c0_i32_1 = arith.constant 0 : i32
    return %c0_i32, %c0_i32_0 : i32, i32
  }
  func.func @transform_16(%arg0: i32) -> (i32, i32) {
    %c0_i32 = arith.constant 0 : i32
    %c0_i32_0 = arith.constant 0 : i32
    %c0_i32_1 = arith.constant 0 : i32
    return %c0_i32, %c0_i32_0 : i32, i32
  }
  func.func @transform_17(%arg0: i32) -> (i32, i32) {
    %c0_i32 = arith.constant 0 : i32
    %c0_i32_0 = arith.constant 0 : i32
    %c0_i32_1 = arith.constant 0 : i32
    return %c0_i32, %c0_i32_0 : i32, i32
  }
  func.func @transform_18(%arg0: i32) -> (i32, i32) {
    %c0_i32 = arith.constant 0 : i32
    %c0_i32_0 = arith.constant 0 : i32
    %c0_i32_1 = arith.constant 0 : i32
    return %c0_i32, %c0_i32_0 : i32, i32
  }
  func.func @transform_19(%arg0: i32) -> (i32, i32) {
    %c0_i32 = arith.constant 0 : i32
    %c0_i32_0 = arith.constant 0 : i32
    %c0_i32_1 = arith.constant 0 : i32
    return %c0_i32, %c0_i32_0 : i32, i32
  }
  func.func @transform_20(%arg0: i32) -> (i32, i32) {
    %c0_i32 = arith.constant 0 : i32
    %c0_i32_0 = arith.constant 0 : i32
    %c0_i32_1 = arith.constant 0 : i32
    return %c0_i32, %c0_i32_0 : i32, i32
  }
  func.func @transform_21(%arg0: i32) -> (i32, i32, i32) {
    %c0_i32 = arith.constant 0 : i32
    %c0_i32_0 = arith.constant 0 : i32
    %c0_i32_1 = arith.constant 0 : i32
    return %arg0, %c0_i32, %c0_i32_0 : i32, i32, i32
  }
  func.func @transform_22(%arg0: i32) -> (i32, i32, i32) {
    %c0_i32 = arith.constant 0 : i32
    %c0_i32_0 = arith.constant 0 : i32
    %c0_i32_1 = arith.constant 0 : i32
    return %arg0, %c0_i32, %c0_i32_0 : i32, i32, i32
  }
  func.func @transform_23(%arg0: i32) -> (i32, i32, i32) {
    %c0_i32 = arith.constant 0 : i32
    %c0_i32_0 = arith.constant 0 : i32
    %c0_i32_1 = arith.constant 0 : i32
    return %arg0, %c0_i32, %c0_i32_0 : i32, i32, i32
  }
}

</mosaic_0001>

<llo_original>
// kernel: forward.1
$region0: #{forward.1}
  #allocation0 [shape = 'u32[]', space=smem, size = 0x4, offset = 0x4, fixed_abs, tag = 'smem constant byte address 0x4 - core index']
  #allocation1 [shape = 'u32[72,128]{1,0:T(1,128)}', space=vmem, size = 0x9000, scoped, tag = 'internal scratch']
  #allocation2 [shape = 'f32[1,1]{1,0:T(1,128)S(6)}', space=smem, size = 0x200, scoped, tag = 'scoped memory for forward.1']
  %s0 = inlined_call_operand.vmem [shape: f32[2,16,4], index: 0, kind: input, shape index: {}]
  %s1 = inlined_call_operand.vmem [shape: f32[4,32], index: 1, kind: input, shape index: {}]
  %s2 = inlined_call_operand.vmem [shape: f32[1,32], index: 2, kind: input, shape index: {}]
  %s3 = inlined_call_operand.vmem [shape: f32[32,16], index: 3, kind: input, shape index: {}]
  %s4 = inlined_call_operand.vmem [shape: f32[1,16], index: 4, kind: input, shape index: {}]
  %s5 = inlined_call_operand.vmem [shape: f32[32,32], index: 5, kind: input, shape index: {}]
  %s6 = inlined_call_operand.vmem [shape: f32[1,32], index: 6, kind: input, shape index: {}]
  %s7 = inlined_call_operand.vmem [shape: f32[8,16], index: 7, kind: input, shape index: {}]
  %s8 = inlined_call_operand.vmem [shape: f32[16,32], index: 8, kind: input, shape index: {}]
  %s9 = inlined_call_operand.vmem [shape: f32[1,32], index: 9, kind: input, shape index: {}]
  %s10 = inlined_call_operand.vmem [shape: f32[32,32], index: 10, kind: input, shape index: {}]
  %s11 = inlined_call_operand.vmem [shape: f32[1,32], index: 11, kind: input, shape index: {}]
  %s12 = inlined_call_operand.vmem [shape: f32[32,8], index: 12, kind: input, shape index: {}]
  %s13 = inlined_call_operand.vmem [shape: f32[1,8], index: 13, kind: input, shape index: {}]
  %s14 = inlined_call_operand.vmem [shape: f32[8,8], index: 14, kind: input, shape index: {}]
  %s15 = inlined_call_operand.vmem [shape: f32[16,512], index: 15, kind: input, shape index: {}]
  %s16 = inlined_call_operand.vmem [shape: f32[1,512], index: 16, kind: input, shape index: {}]
  %s17 = inlined_call_operand.vmem [shape: f32[8,32], index: 17, kind: input, shape index: {}]
  %s18 = inlined_call_operand.vmem [shape: f32[1,32], index: 18, kind: input, shape index: {}]
  %s19 = inlined_call_operand.vmem [shape: f32[1,32], index: 19, kind: input, shape index: {}]
  %s20 = inlined_call_operand.<no memory space> [shape: f32[1,1], index: 20, kind: input, shape index: {}]
  %s21 = inlined_call_operand.hbm [shape: f32[2,1,16], index: 21, kind: output, shape index: {0}]
  %s22 = inlined_call_operand.hbm [shape: f32[2,8,16], index: 22, kind: output, shape index: {1}]
  %s23 = inlined_call_operand.hbm [shape: f32[2,1,8], index: 23, kind: output, shape index: {2}]
  %24 = xla_tuple %s21, %s22, %s23
  %s25 = sld [smem:[#allocation0]]
  $region133: #{forward.1} parent=0
    _
  %s27 = ssub.s32 1, %s25
  %s28 = scalar_select 0, %s27, %s25
  %29 = sst [smem:[#allocation2]] %s20
  $region1: #{forward.1} parent=0
    #allocation3 [shape = 'u8[1024]{0}', space=vmem, size = 0x400, scoped, tag = 'output window, operand 0']
    #allocation4 [shape = 's32[2]{0}', space=sflag, size = 0x8, scoped, tag = 'scoped memory for forward.1']
    #allocation5 [shape = 'u8[8192]{0}', space=vmem, size = 0x2000, scoped, tag = 'output window, operand 1']
    #allocation6 [shape = 's32[2]{0}', space=sflag, size = 0x8, scoped, tag = 'scoped memory for forward.1']
    #allocation7 [shape = 'u8[1024]{0}', space=vmem, size = 0x400, scoped, tag = 'output window, operand 2']
    %30 = vsyncpa [#allocation4], 0
    %s31 = scalar_lea.sflag [#allocation4], 1
    %32 = vsyncpa %s31, 0
    %33 = vsyncpa [#allocation6], 0
    %s34 = scalar_lea.sflag [#allocation6], 1
    %35 = vsyncpa %s34, 0
    loop: start=0, step=1, limit=4
    $region2: #{forward.1} parent=1 // loop_pre_header
      _
    $region3: #{forward.1} parent=1 // loop_header
      %s37 = sphi 0, %s41
      %p38 = scmp.ge.s32.totalorder %s37, 4
      %s47 = sphi 0, %s49
      %s50 = sphi 0, %s47
      %s51 = sphi 0, %s50
      %s67 = sphi 0, %s51
      %s71 = sphi 0, %s71
      %s73 = sphi 0, %s71
      %s74 = sphi 0, %s73
      %s88 = sphi 0, %s74
      %s92 = sphi 0, %s92
      %s94 = sphi 0, %s92
      %s95 = sphi 0, %s94
      %s109 = sphi 0, %s95
      %s113 = sphi 0, %s113
      %s115 = sphi 0, %s113
      %s116 = sphi 0, %s115
      %s130 = sphi 0, %s116
      %s134 = sphi 0, %s134
      %s136 = sphi 0, %s134
      %s137 = sphi 0, %s136
      %s151 = sphi 0, %s137
      %s155 = sphi 0, %s155
      %s157 = sphi 0, %s155
      %s158 = sphi 0, %s157
      %s172 = sphi 0, %s158
      %s176 = sphi 0, %s176
      %s178 = sphi 0, %s176
      %s179 = sphi 0, %s178
      %s193 = sphi 0, %s179
      %s197 = sphi 0, %s197
      %s199 = sphi 0, %s197
      %s200 = sphi 0, %s199
      %s214 = sphi 0, %s200
      %s218 = sphi 0, %s218
      %s220 = sphi 0, %s218
      %s221 = sphi 0, %s220
      %s235 = sphi 0, %s221
      %s239 = sphi 0, %s239
      %s241 = sphi 0, %s239
      %s242 = sphi 0, %s241
      %s256 = sphi 0, %s242
      %s260 = sphi 0, %s260
      %s262 = sphi 0, %s260
      %s263 = sphi 0, %s262
      %s277 = sphi 0, %s263
      %s281 = sphi 0, %s281
      %s283 = sphi 0, %s281
      %s284 = sphi 0, %s283
      %s298 = sphi 0, %s284
      %s302 = sphi 0, %s302
      %s304 = sphi 0, %s302
      %s305 = sphi 0, %s304
      %s319 = sphi 0, %s305
      %s323 = sphi 0, %s323
      %s325 = sphi 0, %s323
      %s326 = sphi 0, %s325
      %s340 = sphi 0, %s326
      %s344 = sphi 0, %s344
      %s346 = sphi 0, %s344
      %s347 = sphi 0, %s346
      %s361 = sphi 0, %s347
      %s365 = sphi 0, %s365
      %s367 = sphi 0, %s365
      %s368 = sphi 0, %s367
      %s382 = sphi 0, %s368
      %s386 = sphi 0, %s386
      %s388 = sphi 0, %s386
      %s389 = sphi 0, %s388
      %s403 = sphi 0, %s389
      %s407 = sphi 0, %s407
      %s409 = sphi 0, %s407
      %s410 = sphi 0, %s409
      %s424 = sphi 0, %s410
      %s428 = sphi 0, %s428
      %s430 = sphi 0, %s428
      %s431 = sphi 0, %s430
      %s445 = sphi 0, %s431
      %s449 = sphi 0, %s449
      %s451 = sphi 0, %s449
      %s452 = sphi 0, %s451
      %s466 = sphi 0, %s452
      %s470 = sphi 0, %s470
      %s472 = sphi 0, %s470
      %s473 = sphi 0, %s472
      %s487 = sphi 0, %s473
      %s493 = sphi 0, %s495
      %s496 = sphi 0, %s493
      %s497 = sphi 0, %s496
      %s513 = sphi 0, %s497
      %s519 = sphi 0, %s521
      %s522 = sphi 0, %s519
      %s523 = sphi 0, %s522
      %s539 = sphi 0, %s523
      %s545 = sphi 0, %s547
      %s548 = sphi 0, %s545
      %s549 = sphi 0, %s548
      %s565 = sphi 0, %s549
    $region4: #{forward.1} parent=1 // loop_header_branch
      %40 = sbr.rel (%p38) target = $region8
    $region5: #{forward.1} parent=1 // loop_body
      %s42 = ssub.s32 %s37, 1
      %s43 = ssub.s32 %s37, 2
      %s44 = sadd.s32 %s37, 1
      %s45 = ssub.s32 %s37, %s44
      %p46 = scmp.eq.s32.totalorder %s45, 0
      %s48 = sadd.s32 %s47, 1
      %s49 = scalar_select %p46, %s47, %s48
      %p52 = pneg %p46
      %p53 = scmp.eq.s32.totalorder %s37, 1
      %p54 = por %p52, %p53
      %p55 = scmp.ne.s32.totalorder %s47, %s50
      %p56 = scmp.eq.s32.totalorder %s37, 0
      %p57 = por %p55, %p56
      %p58 = scmp.ne.s32.totalorder %s47, %s50
      %p59 = scmp.eq.s32.totalorder %s42, 1
      %p60 = por %p58, %p59
      %p61 = scmp.ne.s32.totalorder %s50, %s51
      %p62 = scmp.eq.s32.totalorder %s42, 0
      %p63 = por %p61, %p62
      %p64 = scmp.ne.s32.totalorder %s50, %s51
      %p65 = scmp.eq.s32.totalorder %s43, 1
      %p66 = por %p64, %p65
      %p68 = scmp.ne.s32.totalorder %s51, %s67
      %p69 = scmp.eq.s32.totalorder %s43, 0
      %p70 = por %p68, %p69
      %s72 = sadd.s32 %s71, 1
      %p75 = scmp.eq.s32.totalorder %s37, 1
      %p76 = scmp.ne.s32.totalorder %s71, %s73
      %p77 = scmp.eq.s32.totalorder %s37, 0
      %p78 = por %p76, %p77
      %p79 = scmp.ne.s32.totalorder %s71, %s73
      %p80 = scmp.eq.s32.totalorder %s42, 1
      %p81 = por %p79, %p80
      %p82 = scmp.ne.s32.totalorder %s73, %s74
      %p83 = scmp.eq.s32.totalorder %s42, 0
      %p84 = por %p82, %p83
      %p85 = scmp.ne.s32.totalorder %s73, %s74
      %p86 = scmp.eq.s32.totalorder %s43, 1
      %p87 = por %p85, %p86
      %p89 = scmp.ne.s32.totalorder %s74, %s88
      %p90 = scmp.eq.s32.totalorder %s43, 0
      %p91 = por %p89, %p90
      %s93 = sadd.s32 %s92, 1
      %p96 = scmp.eq.s32.totalorder %s37, 1
      %p97 = scmp.ne.s32.totalorder %s92, %s94
      %p98 = scmp.eq.s32.totalorder %s37, 0
      %p99 = por %p97, %p98
      %p100 = scmp.ne.s32.totalorder %s92, %s94
      %p101 = scmp.eq.s32.totalorder %s42, 1
      %p102 = por %p100, %p101
      %p103 = scmp.ne.s32.totalorder %s94, %s95
      %p104 = scmp.eq.s32.totalorder %s42, 0
      %p105 = por %p103, %p104
      %p106 = scmp.ne.s32.totalorder %s94, %s95
      %p107 = scmp.eq.s32.totalorder %s43, 1
      %p108 = por %p106, %p107
      %p110 = scmp.ne.s32.totalorder %s95, %s109
      %p111 = scmp.eq.s32.totalorder %s43, 0
      %p112 = por %p110, %p111
      %s114 = sadd.s32 %s113, 1
      %p117 = scmp.eq.s32.totalorder %s37, 1
      %p118 = scmp.ne.s32.totalorder %s113, %s115
      %p119 = scmp.eq.s32.totalorder %s37, 0
      %p120 = por %p118, %p119
      %p121 = scmp.ne.s32.totalorder %s113, %s115
      %p122 = scmp.eq.s32.totalorder %s42, 1
      %p123 = por %p121, %p122
      %p124 = scmp.ne.s32.totalorder %s115, %s116
      %p125 = scmp.eq.s32.totalorder %s42, 0
      %p126 = por %p124, %p125
      %p127 = scmp.ne.s32.totalorder %s115, %s116
      %p128 = scmp.eq.s32.totalorder %s43, 1
      %p129 = por %p127, %p128
      %p131 = scmp.ne.s32.totalorder %s116, %s130
      %p132 = scmp.eq.s32.totalorder %s43, 0
      %p133 = por %p131, %p132
      %s135 = sadd.s32 %s134, 1
      %p138 = scmp.eq.s32.totalorder %s37, 1
      %p139 = scmp.ne.s32.totalorder %s134, %s136
      %p140 = scmp.eq.s32.totalorder %s37, 0
      %p141 = por %p139, %p140
      %p142 = scmp.ne.s32.totalorder %s134, %s136
      %p143 = scmp.eq.s32.totalorder %s42, 1
      %p144 = por %p142, %p143
      %p145 = scmp.ne.s32.totalorder %s136, %s137
      %p146 = scmp.eq.s32.totalorder %s42, 0
      %p147 = por %p145, %p146
      %p148 = scmp.ne.s32.totalorder %s136, %s137
      %p149 = scmp.eq.s32.totalorder %s43, 1
      %p150 = por %p148, %p149
      %p152 = scmp.ne.s32.totalorder %s137, %s151
      %p153 = scmp.eq.s32.totalorder %s43, 0
      %p154 = por %p152, %p153
      %s156 = sadd.s32 %s155, 1
      %p159 = scmp.eq.s32.totalorder %s37, 1
      %p160 = scmp.ne.s32.totalorder %s155, %s157
      %p161 = scmp.eq.s32.totalorder %s37, 0
      %p162 = por %p160, %p161
      %p163 = scmp.ne.s32.totalorder %s155, %s157
      %p164 = scmp.eq.s32.totalorder %s42, 1
      %p165 = por %p163, %p164
      %p166 = scmp.ne.s32.totalorder %s157, %s158
      %p167 = scmp.eq.s32.totalorder %s42, 0
      %p168 = por %p166, %p167
      %p169 = scmp.ne.s32.totalorder %s157, %s158
      %p170 = scmp.eq.s32.totalorder %s43, 1
      %p171 = por %p169, %p170
      %p173 = scmp.ne.s32.totalorder %s158, %s172
      %p174 = scmp.eq.s32.totalorder %s43, 0
      %p175 = por %p173, %p174
      %s177 = sadd.s32 %s176, 1
      %p180 = scmp.eq.s32.totalorder %s37, 1
      %p181 = scmp.ne.s32.totalorder %s176, %s178
      %p182 = scmp.eq.s32.totalorder %s37, 0
      %p183 = por %p181, %p182
      %p184 = scmp.ne.s32.totalorder %s176, %s178
      %p185 = scmp.eq.s32.totalorder %s42, 1
      %p186 = por %p184, %p185
      %p187 = scmp.ne.s32.totalorder %s178, %s179
      %p188 = scmp.eq.s32.totalorder %s42, 0
      %p189 = por %p187, %p188
      %p190 = scmp.ne.s32.totalorder %s178, %s179
      %p191 = scmp.eq.s32.totalorder %s43, 1
      %p192 = por %p190, %p191
      %p194 = scmp.ne.s32.totalorder %s179, %s193
      %p195 = scmp.eq.s32.totalorder %s43, 0
      %p196 = por %p194, %p195
      %s198 = sadd.s32 %s197, 1
      %p201 = scmp.eq.s32.totalorder %s37, 1
      %p202 = scmp.ne.s32.totalorder %s197, %s199
      %p203 = scmp.eq.s32.totalorder %s37, 0
      %p204 = por %p202, %p203
      %p205 = scmp.ne.s32.totalorder %s197, %s199
      %p206 = scmp.eq.s32.totalorder %s42, 1
      %p207 = por %p205, %p206
      %p208 = scmp.ne.s32.totalorder %s199, %s200
      %p209 = scmp.eq.s32.totalorder %s42, 0
      %p210 = por %p208, %p209
      %p211 = scmp.ne.s32.totalorder %s199, %s200
      %p212 = scmp.eq.s32.totalorder %s43, 1
      %p213 = por %p211, %p212
      %p215 = scmp.ne.s32.totalorder %s200, %s214
      %p216 = scmp.eq.s32.totalorder %s43, 0
      %p217 = por %p215, %p216
      %s219 = sadd.s32 %s218, 1
      %p222 = scmp.eq.s32.totalorder %s37, 1
      %p223 = scmp.ne.s32.totalorder %s218, %s220
      %p224 = scmp.eq.s32.totalorder %s37, 0
      %p225 = por %p223, %p224
      %p226 = scmp.ne.s32.totalorder %s218, %s220
      %p227 = scmp.eq.s32.totalorder %s42, 1
      %p228 = por %p226, %p227
      %p229 = scmp.ne.s32.totalorder %s220, %s221
      %p230 = scmp.eq.s32.totalorder %s42, 0
      %p231 = por %p229, %p230
      %p232 = scmp.ne.s32.totalorder %s220, %s221
      %p233 = scmp.eq.s32.totalorder %s43, 1
      %p234 = por %p232, %p233
      %p236 = scmp.ne.s32.totalorder %s221, %s235
      %p237 = scmp.eq.s32.totalorder %s43, 0
      %p238 = por %p236, %p237
      %s240 = sadd.s32 %s239, 1
      %p243 = scmp.eq.s32.totalorder %s37, 1
      %p244 = scmp.ne.s32.totalorder %s239, %s241
      %p245 = scmp.eq.s32.totalorder %s37, 0
      %p246 = por %p244, %p245
      %p247 = scmp.ne.s32.totalorder %s239, %s241
      %p248 = scmp.eq.s32.totalorder %s42, 1
      %p249 = por %p247, %p248
      %p250 = scmp.ne.s32.totalorder %s241, %s242
      %p251 = scmp.eq.s32.totalorder %s42, 0
      %p252 = por %p250, %p251
      %p253 = scmp.ne.s32.totalorder %s241, %s242
      %p254 = scmp.eq.s32.totalorder %s43, 1
      %p255 = por %p253, %p254
      %p257 = scmp.ne.s32.totalorder %s242, %s256
      %p258 = scmp.eq.s32.totalorder %s43, 0
      %p259 = por %p257, %p258
      %s261 = sadd.s32 %s260, 1
      %p264 = scmp.eq.s32.totalorder %s37, 1
      %p265 = scmp.ne.s32.totalorder %s260, %s262
      %p266 = scmp.eq.s32.totalorder %s37, 0
      %p267 = por %p265, %p266
      %p268 = scmp.ne.s32.totalorder %s260, %s262
      %p269 = scmp.eq.s32.totalorder %s42, 1
      %p270 = por %p268, %p269
      %p271 = scmp.ne.s32.totalorder %s262, %s263
      %p272 = scmp.eq.s32.totalorder %s42, 0
      %p273 = por %p271, %p272
      %p274 = scmp.ne.s32.totalorder %s262, %s263
      %p275 = scmp.eq.s32.totalorder %s43, 1
      %p276 = por %p274, %p275
      %p278 = scmp.ne.s32.totalorder %s263, %s277
      %p279 = scmp.eq.s32.totalorder %s43, 0
      %p280 = por %p278, %p279
      %s282 = sadd.s32 %s281, 1
      %p285 = scmp.eq.s32.totalorder %s37, 1
      %p286 = scmp.ne.s32.totalorder %s281, %s283
      %p287 = scmp.eq.s32.totalorder %s37, 0
      %p288 = por %p286, %p287
      %p289 = scmp.ne.s32.totalorder %s281, %s283
      %p290 = scmp.eq.s32.totalorder %s42, 1
      %p291 = por %p289, %p290
      %p292 = scmp.ne.s32.totalorder %s283, %s284
      %p293 = scmp.eq.s32.totalorder %s42, 0
      %p294 = por %p292, %p293
      %p295 = scmp.ne.s32.totalorder %s283, %s284
      %p296 = scmp.eq.s32.totalorder %s43, 1
      %p297 = por %p295, %p296
      %p299 = scmp.ne.s32.totalorder %s284, %s298
      %p300 = scmp.eq.s32.totalorder %s43, 0
      %p301 = por %p299, %p300
      %s303 = sadd.s32 %s302, 1
      %p306 = scmp.eq.s32.totalorder %s37, 1
      %p307 = scmp.ne.s32.totalorder %s302, %s304
      %p308 = scmp.eq.s32.totalorder %s37, 0
      %p309 = por %p307, %p308
      %p310 = scmp.ne.s32.totalorder %s302, %s304
      %p311 = scmp.eq.s32.totalorder %s42, 1
      %p312 = por %p310, %p311
      %p313 = scmp.ne.s32.totalorder %s304, %s305
      %p314 = scmp.eq.s32.totalorder %s42, 0
      %p315 = por %p313, %p314
      %p316 = scmp.ne.s32.totalorder %s304, %s305
      %p317 = scmp.eq.s32.totalorder %s43, 1
      %p318 = por %p316, %p317
      %p320 = scmp.ne.s32.totalorder %s305, %s319
      %p321 = scmp.eq.s32.totalorder %s43, 0
      %p322 = por %p320, %p321
      %s324 = sadd.s32 %s323, 1
      %p327 = scmp.eq.s32.totalorder %s37, 1
      %p328 = scmp.ne.s32.totalorder %s323, %s325
      %p329 = scmp.eq.s32.totalorder %s37, 0
      %p330 = por %p328, %p329
      %p331 = scmp.ne.s32.totalorder %s323, %s325
      %p332 = scmp.eq.s32.totalorder %s42, 1
      %p333 = por %p331, %p332
      %p334 = scmp.ne.s32.totalorder %s325, %s326
      %p335 = scmp.eq.s32.totalorder %s42, 0
      %p336 = por %p334, %p335
      %p337 = scmp.ne.s32.totalorder %s325, %s326
      %p338 = scmp.eq.s32.totalorder %s43, 1
      %p339 = por %p337, %p338
      %p341 = scmp.ne.s32.totalorder %s326, %s340
      %p342 = scmp.eq.s32.totalorder %s43, 0
      %p343 = por %p341, %p342
      %s345 = sadd.s32 %s344, 1
      %p348 = scmp.eq.s32.totalorder %s37, 1
      %p349 = scmp.ne.s32.totalorder %s344, %s346
      %p350 = scmp.eq.s32.totalorder %s37, 0
      %p351 = por %p349, %p350
      %p352 = scmp.ne.s32.totalorder %s344, %s346
      %p353 = scmp.eq.s32.totalorder %s42, 1
      %p354 = por %p352, %p353
      %p355 = scmp.ne.s32.totalorder %s346, %s347
      %p356 = scmp.eq.s32.totalorder %s42, 0
      %p357 = por %p355, %p356
      %p358 = scmp.ne.s32.totalorder %s346, %s347
      %p359 = scmp.eq.s32.totalorder %s43, 1
      %p360 = por %p358, %p359
      %p362 = scmp.ne.s32.totalorder %s347, %s361
      %p363 = scmp.eq.s32.totalorder %s43, 0
      %p364 = por %p362, %p363
      %s366 = sadd.s32 %s365, 1
      %p369 = scmp.eq.s32.totalorder %s37, 1
      %p370 = scmp.ne.s32.totalorder %s365, %s367
      %p371 = scmp.eq.s32.totalorder %s37, 0
      %p372 = por %p370, %p371
      %p373 = scmp.ne.s32.totalorder %s365, %s367
      %p374 = scmp.eq.s32.totalorder %s42, 1
      %p375 = por %p373, %p374
      %p376 = scmp.ne.s32.totalorder %s367, %s368
      %p377 = scmp.eq.s32.totalorder %s42, 0
      %p378 = por %p376, %p377
      %p379 = scmp.ne.s32.totalorder %s367, %s368
      %p380 = scmp.eq.s32.totalorder %s43, 1
      %p381 = por %p379, %p380
      %p383 = scmp.ne.s32.totalorder %s368, %s382
      %p384 = scmp.eq.s32.totalorder %s43, 0
      %p385 = por %p383, %p384
      %s387 = sadd.s32 %s386, 1
      %p390 = scmp.eq.s32.totalorder %s37, 1
      %p391 = scmp.ne.s32.totalorder %s386, %s388
      %p392 = scmp.eq.s32.totalorder %s37, 0
      %p393 = por %p391, %p392
      %p394 = scmp.ne.s32.totalorder %s386, %s388
      %p395 = scmp.eq.s32.totalorder %s42, 1
      %p396 = por %p394, %p395
      %p397 = scmp.ne.s32.totalorder %s388, %s389
      %p398 = scmp.eq.s32.totalorder %s42, 0
      %p399 = por %p397, %p398
      %p400 = scmp.ne.s32.totalorder %s388, %s389
      %p401 = scmp.eq.s32.totalorder %s43, 1
      %p402 = por %p400, %p401
      %p404 = scmp.ne.s32.totalorder %s389, %s403
      %p405 = scmp.eq.s32.totalorder %s43, 0
      %p406 = por %p404, %p405
      %s408 = sadd.s32 %s407, 1
      %p411 = scmp.eq.s32.totalorder %s37, 1
      %p412 = scmp.ne.s32.totalorder %s407, %s409
      %p413 = scmp.eq.s32.totalorder %s37, 0
      %p414 = por %p412, %p413
      %p415 = scmp.ne.s32.totalorder %s407, %s409
      %p416 = scmp.eq.s32.totalorder %s42, 1
      %p417 = por %p415, %p416
      %p418 = scmp.ne.s32.totalorder %s409, %s410
      %p419 = scmp.eq.s32.totalorder %s42, 0
      %p420 = por %p418, %p419
      %p421 = scmp.ne.s32.totalorder %s409, %s410
      %p422 = scmp.eq.s32.totalorder %s43, 1
      %p423 = por %p421, %p422
      %p425 = scmp.ne.s32.totalorder %s410, %s424
      %p426 = scmp.eq.s32.totalorder %s43, 0
      %p427 = por %p425, %p426
      %s429 = sadd.s32 %s428, 1
      %p432 = scmp.eq.s32.totalorder %s37, 1
      %p433 = scmp.ne.s32.totalorder %s428, %s430
      %p434 = scmp.eq.s32.totalorder %s37, 0
      %p435 = por %p433, %p434
      %p436 = scmp.ne.s32.totalorder %s428, %s430
      %p437 = scmp.eq.s32.totalorder %s42, 1
      %p438 = por %p436, %p437
      %p439 = scmp.ne.s32.totalorder %s430, %s431
      %p440 = scmp.eq.s32.totalorder %s42, 0
      %p441 = por %p439, %p440
      %p442 = scmp.ne.s32.totalorder %s430, %s431
      %p443 = scmp.eq.s32.totalorder %s43, 1
      %p444 = por %p442, %p443
      %p446 = scmp.ne.s32.totalorder %s431, %s445
      %p447 = scmp.eq.s32.totalorder %s43, 0
      %p448 = por %p446, %p447
      %s450 = sadd.s32 %s449, 1
      %p453 = scmp.eq.s32.totalorder %s37, 1
      %p454 = scmp.ne.s32.totalorder %s449, %s451
      %p455 = scmp.eq.s32.totalorder %s37, 0
      %p456 = por %p454, %p455
      %p457 = scmp.ne.s32.totalorder %s449, %s451
      %p458 = scmp.eq.s32.totalorder %s42, 1
      %p459 = por %p457, %p458
      %p460 = scmp.ne.s32.totalorder %s451, %s452
      %p461 = scmp.eq.s32.totalorder %s42, 0
      %p462 = por %p460, %p461
      %p463 = scmp.ne.s32.totalorder %s451, %s452
      %p464 = scmp.eq.s32.totalorder %s43, 1
      %p465 = por %p463, %p464
      %p467 = scmp.ne.s32.totalorder %s452, %s466
      %p468 = scmp.eq.s32.totalorder %s43, 0
      %p469 = por %p467, %p468
      %s471 = sadd.s32 %s470, 1
      %p474 = scmp.eq.s32.totalorder %s37, 1
      %p475 = scmp.ne.s32.totalorder %s470, %s472
      %p476 = scmp.eq.s32.totalorder %s37, 0
      %p477 = por %p475, %p476
      %p478 = scmp.ne.s32.totalorder %s470, %s472
      %p479 = scmp.eq.s32.totalorder %s42, 1
      %p480 = por %p478, %p479
      %p481 = scmp.ne.s32.totalorder %s472, %s473
      %p482 = scmp.eq.s32.totalorder %s42, 0
      %p483 = por %p481, %p482
      %p484 = scmp.ne.s32.totalorder %s472, %s473
      %p485 = scmp.eq.s32.totalorder %s43, 1
      %p486 = por %p484, %p485
      %p488 = scmp.ne.s32.totalorder %s473, %s487
      %p489 = scmp.eq.s32.totalorder %s43, 0
      %p490 = por %p488, %p489
      %s491 = ssub.s32 %s37, %s44
      %p492 = scmp.eq.s32.totalorder %s491, 0
      %s494 = sadd.s32 %s493, 1
      %s495 = scalar_select %p492, %s493, %s494
      %p498 = pneg %p492
      %p499 = scmp.eq.s32.totalorder %s37, 1
      %p500 = por %p498, %p499
      %p501 = scmp.ne.s32.totalorder %s493, %s496
      %p502 = scmp.eq.s32.totalorder %s37, 0
      %p503 = por %p501, %p502
      %p504 = scmp.ne.s32.totalorder %s493, %s496
      %p505 = scmp.eq.s32.totalorder %s42, 1
      %p506 = por %p504, %p505
      %p507 = scmp.ne.s32.totalorder %s496, %s497
      %p508 = scmp.eq.s32.totalorder %s42, 0
      %p509 = por %p507, %p508
      %p510 = scmp.ne.s32.totalorder %s496, %s497
      %p511 = scmp.eq.s32.totalorder %s43, 1
      %p512 = por %p510, %p511
      %p514 = scmp.ne.s32.totalorder %s497, %s513
      %p515 = scmp.eq.s32.totalorder %s43, 0
      %p516 = por %p514, %p515
      %s517 = ssub.s32 %s37, %s44
      %p518 = scmp.eq.s32.totalorder %s517, 0
      %s520 = sadd.s32 %s519, 1
      %s521 = scalar_select %p518, %s519, %s520
      %p524 = pneg %p518
      %p525 = scmp.eq.s32.totalorder %s37, 1
      %p526 = por %p524, %p525
      %p527 = scmp.ne.s32.totalorder %s519, %s522
      %p528 = scmp.eq.s32.totalorder %s37, 0
      %p529 = por %p527, %p528
      %p530 = scmp.ne.s32.totalorder %s519, %s522
      %p531 = scmp.eq.s32.totalorder %s42, 1
      %p532 = por %p530, %p531
      %p533 = scmp.ne.s32.totalorder %s522, %s523
      %p534 = scmp.eq.s32.totalorder %s42, 0
      %p535 = por %p533, %p534
      %p536 = scmp.ne.s32.totalorder %s522, %s523
      %p537 = scmp.eq.s32.totalorder %s43, 1
      %p538 = por %p536, %p537
      %p540 = scmp.ne.s32.totalorder %s523, %s539
      %p541 = scmp.eq.s32.totalorder %s43, 0
      %p542 = por %p540, %p541
      %s543 = ssub.s32 %s37, %s44
      %p544 = scmp.eq.s32.totalorder %s543, 0
      %s546 = sadd.s32 %s545, 1
      %s547 = scalar_select %p544, %s545, %s546
      %p550 = pneg %p544
      %p551 = scmp.eq.s32.totalorder %s37, 1
      %p552 = por %p550, %p551
      %p553 = scmp.ne.s32.totalorder %s545, %s548
      %p554 = scmp.eq.s32.totalorder %s37, 0
      %p555 = por %p553, %p554
      %p556 = scmp.ne.s32.totalorder %s545, %s548
      %p557 = scmp.eq.s32.totalorder %s42, 1
      %p558 = por %p556, %p557
      %p559 = scmp.ne.s32.totalorder %s548, %s549
      %p560 = scmp.eq.s32.totalorder %s42, 0
      %p561 = por %p559, %p560
      %p562 = scmp.ne.s32.totalorder %s548, %s549
      %p563 = scmp.eq.s32.totalorder %s43, 1
      %p564 = por %p562, %p563
      %p566 = scmp.ne.s32.totalorder %s549, %s565
      %p567 = scmp.eq.s32.totalorder %s43, 0
      %p568 = por %p566, %p567
      %p569 = scmp.le.s32.totalorder 1, %s37
      %p570 = scmp.lt.s32.totalorder %s37, 3
      %p571 = pnand %p569, %p570
      %p572 = pneg %p571
      // Predicated region
      $region9: #{forward.1} parent=5 // pred_check
        _
      $region10: #{forward.1} parent=5 // pred_check_branch
        %574 = sbr.rel (%p571) target = $region12
      $region11: #{forward.1} parent=5 // pred_region
        %s575 = ssub.s32 %s37, 1
        // Predicated region
        $region13: #{forward.1} parent=11 // pred_check
          %p576 = pneg %p84
        $region14: #{forward.1} parent=11 // pred_check_branch
          %578 = sbr.rel (%p576) target = $region16
        $region15: #{forward.1} parent=11 // pred_region
          _
        $region16: #{forward.1} parent=11 // pred_fallthru
          _
        // Predicated region
        $region17: #{forward.1} parent=11 // pred_check
          %p579 = pneg %p105
        $region18: #{forward.1} parent=11 // pred_check_branch
          %581 = sbr.rel (%p579) target = $region20
        $region19: #{forward.1} parent=11 // pred_region
          _
        $region20: #{forward.1} parent=11 // pred_fallthru
          _
        // Predicated region
        $region21: #{forward.1} parent=11 // pred_check
          %p582 = pneg %p126
        $region22: #{forward.1} parent=11 // pred_check_branch
          %584 = sbr.rel (%p582) target = $region24
        $region23: #{forward.1} parent=11 // pred_region
          _
        $region24: #{forward.1} parent=11 // pred_fallthru
          _
        // Predicated region
        $region25: #{forward.1} parent=11 // pred_check
          %p585 = pneg %p147
        $region26: #{forward.1} parent=11 // pred_check_branch
          %587 = sbr.rel (%p585) target = $region28
        $region27: #{forward.1} parent=11 // pred_region
          _
        $region28: #{forward.1} parent=11 // pred_fallthru
          _
        // Predicated region
        $region29: #{forward.1} parent=11 // pred_check
          %p588 = pneg %p168
        $region30: #{forward.1} parent=11 // pred_check_branch
          %590 = sbr.rel (%p588) target = $region32
        $region31: #{forward.1} parent=11 // pred_region
          _
        $region32: #{forward.1} parent=11 // pred_fallthru
          _
        // Predicated region
        $region33: #{forward.1} parent=11 // pred_check
          %p591 = pneg %p189
        $region34: #{forward.1} parent=11 // pred_check_branch
          %593 = sbr.rel (%p591) target = $region36
        $region35: #{forward.1} parent=11 // pred_region
          _
        $region36: #{forward.1} parent=11 // pred_fallthru
          _
        // Predicated region
        $region37: #{forward.1} parent=11 // pred_check
          %p594 = pneg %p210
        $region38: #{forward.1} parent=11 // pred_check_branch
          %596 = sbr.rel (%p594) target = $region40
        $region39: #{forward.1} parent=11 // pred_region
          _
        $region40: #{forward.1} parent=11 // pred_fallthru
          _
        // Predicated region
        $region41: #{forward.1} parent=11 // pred_check
          %p597 = pneg %p231
        $region42: #{forward.1} parent=11 // pred_check_branch
          %599 = sbr.rel (%p597) target = $region44
        $region43: #{forward.1} parent=11 // pred_region
          _
        $region44: #{forward.1} parent=11 // pred_fallthru
          _
        // Predicated region
        $region45: #{forward.1} parent=11 // pred_check
          %p600 = pneg %p252
        $region46: #{forward.1} parent=11 // pred_check_branch
          %602 = sbr.rel (%p600) target = $region48
        $region47: #{forward.1} parent=11 // pred_region
          _
        $region48: #{forward.1} parent=11 // pred_fallthru
          _
        // Predicated region
        $region49: #{forward.1} parent=11 // pred_check
          %p603 = pneg %p273
        $region50: #{forward.1} parent=11 // pred_check_branch
          %605 = sbr.rel (%p603) target = $region52
        $region51: #{forward.1} parent=11 // pred_region
          _
        $region52: #{forward.1} parent=11 // pred_fallthru
          _
        // Predicated region
        $region53: #{forward.1} parent=11 // pred_check
          %p606 = pneg %p294
        $region54: #{forward.1} parent=11 // pred_check_branch
          %608 = sbr.rel (%p606) target = $region56
        $region55: #{forward.1} parent=11 // pred_region
          _
        $region56: #{forward.1} parent=11 // pred_fallthru
          _
        // Predicated region
        $region57: #{forward.1} parent=11 // pred_check
          %p609 = pneg %p315
        $region58: #{forward.1} parent=11 // pred_check_branch
          %611 = sbr.rel (%p609) target = $region60
        $region59: #{forward.1} parent=11 // pred_region
          _
        $region60: #{forward.1} parent=11 // pred_fallthru
          _
        // Predicated region
        $region61: #{forward.1} parent=11 // pred_check
          %p612 = pneg %p336
        $region62: #{forward.1} parent=11 // pred_check_branch
          %614 = sbr.rel (%p612) target = $region64
        $region63: #{forward.1} parent=11 // pred_region
          _
        $region64: #{forward.1} parent=11 // pred_fallthru
          _
        // Predicated region
        $region65: #{forward.1} parent=11 // pred_check
          %p615 = pneg %p357
        $region66: #{forward.1} parent=11 // pred_check_branch
          %617 = sbr.rel (%p615) target = $region68
        $region67: #{forward.1} parent=11 // pred_region
          _
        $region68: #{forward.1} parent=11 // pred_fallthru
          _
        // Predicated region
        $region69: #{forward.1} parent=11 // pred_check
          %p618 = pneg %p378
        $region70: #{forward.1} parent=11 // pred_check_branch
          %620 = sbr.rel (%p618) target = $region72
        $region71: #{forward.1} parent=11 // pred_region
          _
        $region72: #{forward.1} parent=11 // pred_fallthru
          _
        // Predicated region
        $region73: #{forward.1} parent=11 // pred_check
          %p621 = pneg %p399
        $region74: #{forward.1} parent=11 // pred_check_branch
          %623 = sbr.rel (%p621) target = $region76
        $region75: #{forward.1} parent=11 // pred_region
          _
        $region76: #{forward.1} parent=11 // pred_fallthru
          _
        // Predicated region
        $region77: #{forward.1} parent=11 // pred_check
          %p624 = pneg %p420
        $region78: #{forward.1} parent=11 // pred_check_branch
          %626 = sbr.rel (%p624) target = $region80
        $region79: #{forward.1} parent=11 // pred_region
          _
        $region80: #{forward.1} parent=11 // pred_fallthru
          _
        // Predicated region
        $region81: #{forward.1} parent=11 // pred_check
          %p627 = pneg %p441
        $region82: #{forward.1} parent=11 // pred_check_branch
          %629 = sbr.rel (%p627) target = $region84
        $region83: #{forward.1} parent=11 // pred_region
          _
        $region84: #{forward.1} parent=11 // pred_fallthru
          _
        // Predicated region
        $region85: #{forward.1} parent=11 // pred_check
          %p630 = pneg %p462
        $region86: #{forward.1} parent=11 // pred_check_branch
          %632 = sbr.rel (%p630) target = $region88
        $region87: #{forward.1} parent=11 // pred_region
          _
        $region88: #{forward.1} parent=11 // pred_fallthru
          _
        // Predicated region
        $region89: #{forward.1} parent=11 // pred_check
          %p633 = pneg %p483
        $region90: #{forward.1} parent=11 // pred_check_branch
          %635 = sbr.rel (%p633) target = $region92
        $region91: #{forward.1} parent=11 // pred_region
          _
        $region92: #{forward.1} parent=11 // pred_fallthru
          _
      $region12: #{forward.1} parent=5 // pred_fallthru
        _
      %p636 = scmp.lt.s32.totalorder %s37, 2
      // Predicated region
      $region93: #{forward.1} parent=5 // pred_check
        %p637 = pneg %p636
      $region94: #{forward.1} parent=5 // pred_check_branch
        %639 = sbr.rel (%p637) target = $region96
      $region95: #{forward.1} parent=5 // pred_region
        // Predicated region
        $region97: #{forward.1} parent=95 // pred_check
          %p640 = pneg %p57
        $region98: #{forward.1} parent=95 // pred_check_branch
          %642 = sbr.rel (%p640) target = $region100
        $region99: #{forward.1} parent=95 // pred_region
          %p643 = scmp.lt.s32.totalorder %s37, 1
          %s644 = scalar_select %p643, %s37, 1
          %s645 = smul.addr %s644, 2
          %s646 = smul.addr %s645, 8
          %s647 = scalar_lea.vmem %s0, %s646
        $region100: #{forward.1} parent=95 // pred_fallthru
          _
      $region96: #{forward.1} parent=5 // pred_fallthru
        _
      %p648 = scmp.le.s32.totalorder 1, %s37
      %p649 = scmp.lt.s32.totalorder %s37, 3
      %p650 = pnand %p648, %p649
      %p651 = pneg %p650
      // Predicated region
      $region101: #{forward.1} parent=5 // pred_check
        _
      $region102: #{forward.1} parent=5 // pred_check_branch
        %653 = sbr.rel (%p650) target = $region104
      $region103: #{forward.1} parent=5 // pred_region
        %s654 = ssub.s32 %s37, 1
        %p655 = scmp.lt.s32.totalorder %s42, 1
        %s656 = scalar_select %p655, %s42, 1
        %s657 = smul.addr %s656, 2
        %s658 = smul.addr %s657, 8
        %s659 = scalar_lea.vmem %s0, %s658
        %p660 = pneg %p63
        %p661 = pneg %p60
        %p662 = pneg %p84
        %p663 = pneg %p81
        %p664 = pneg %p105
        %p665 = pneg %p102
        %p666 = pneg %p126
        %p667 = pneg %p123
        %p668 = pneg %p147
        %p669 = pneg %p144
        %p670 = pneg %p168
        %p671 = pneg %p165
        %p672 = pneg %p189
        %p673 = pneg %p186
        %p674 = pneg %p210
        %p675 = pneg %p207
        %p676 = pneg %p231
        %p677 = pneg %p228
        %p678 = pneg %p252
        %p679 = pneg %p249
        %p680 = pneg %p273
        %p681 = pneg %p270
        %p682 = pneg %p294
        %p683 = pneg %p291
        %p684 = pneg %p315
        %p685 = pneg %p312
        %p686 = pneg %p336
        %p687 = pneg %p333
        %p688 = pneg %p357
        %p689 = pneg %p354
        %p690 = pneg %p378
        %p691 = pneg %p375
        %p692 = pneg %p399
        %p693 = pneg %p396
        %p694 = pneg %p420
        %p695 = pneg %p417
        %p696 = pneg %p441
        %p697 = pneg %p438
        %p698 = pneg %p462
        %p699 = pneg %p459
        %p700 = pneg %p483
        %p701 = pneg %p480
        %p702 = pneg %p509
        %p703 = pneg %p506
        %s704 = sand.u32 %s496, 1
        %s705 = scalar_lea.sflag [#allocation4], %s704
        %s706 = sand.u32 %s496, 1
        %s707 = scalar_lea.vmem [#allocation3], %s706
        %p708 = pneg %p535
        %p709 = pneg %p532
        %s710 = sand.u32 %s42, 1
        %s711 = scalar_lea.sflag [#allocation6], %s710
        %s712 = sand.u32 %s522, 1
        %s713 = smul.addr %s712, 8
        %s714 = scalar_lea.vmem [#allocation5], %s713
        %p715 = pneg %p561
        %p716 = pneg %p558
        %s717 = sand.u32 %s42, 1
        %s718 = scalar_lea.sflag [#allocation6], %s717
        %s719 = sand.u32 %s548, 1
        %s720 = scalar_lea.vmem [#allocation7], %s719
        %p721 = scmp.lt.s32.totalorder %s42, 1
        %s722 = scalar_select %p721, %s42, 1
        %s723 = smul.addr %s722, 2
        %s724 = smul.addr %s723, 8
        %s725 = scalar_lea.vmem %s0, %s724
        %v726 = vld [vmem:[%s725] sm:$0xff]
        %v727 = vld [vmem:[%s725 + $0x8] sm:$0xff]
        %v728 = vld [vmem:[%s1] sm:$0xf]
        %v729 = vld [vmem:[%s2] sm:$0x1]
        %v731 = vperm.slane %v729, 0
        %vm733 = vcmask 31744
        %v735 = vsel %vm733, %v726, 0
        %v738 = vsel %vm733, %v727, 0
        %vm740 = vcmask 1043456
        %v742 = vsel %vm740, %v728, 0
        %744 = vmatpush.msra.mxu0 0.0
        %745 = vmatpush.msra.mxu0 0.0
        %746 = vmatpush.msra.mxu0 0.0
        %747 = vmatpush.msra.mxu0 0.0
        %748 = vmatpush.msra.mxu0 0.0
        %749 = vmatpush.msra.mxu0 0.0
        %750 = vmatpush.msra.mxu0 0.0
        %751 = vmatpush.msra.mxu0 0.0
        %752 = vmatpush.msra.mxu0 0.0
        %753 = vmatpush.msra.mxu0 0.0
        %754 = vmatpush.msra.mxu0 0.0
        %755 = vmatpush.msra.mxu0 0.0
        %756 = vmatpush.msra.mxu0 0.0
        %757 = vmatpush.msra.mxu0 0.0
        %758 = vmatpush.msra.mxu0 0.0
        %759 = vmatpush.msra.mxu0 %v742
        %760 = vmatmul.f32.gmra.mxu0 %v735
        %v761 = vpop.f32.mrf.mxu0
        %v762 = vadd.f32 %v731, %v761
        %763 = vmatmul.f32.gmra.mxu0 %v738
        %v764 = vpop.f32.mrf.mxu0
        %v765 = vadd.f32 %v731, %v764
        %766 = vdwg.mxu0
        %v767 = vmax.f32 %v762, 0.0
        %v768 = vmax.f32 %v765, 0.0
        %vm769 = vcmask 130048
        %v771 = vsel %vm769, 0.0625, 0
        %773 = vmatpush.msra.mxu0 0.0
        %774 = vmatpush.msra.mxu0 0.0
        %775 = vmatpush.msra.mxu0 0.0
        %776 = vmatpush.msra.mxu0 0.0
        %777 = vmatpush.msra.mxu0 0.0
        %778 = vmatpush.msra.mxu0 0.0
        %779 = vmatpush.msra.mxu0 0.0
        %780 = vmatpush.msra.mxu0 0.0
        %781 = vmatpush.msra.mxu0 0.0
        %782 = vmatpush.msra.mxu0 0.0
        %783 = vmatpush.msra.mxu0 0.0
        %784 = vmatpush.msra.mxu0 0.0
        %785 = vmatpush.msra.mxu0 0.0
        %786 = vmatpush.msra.mxu0 0.0
        %787 = vmatpush.msra.mxu0 %v768
        %788 = vmatpush.msra.mxu0 %v767
        %789 = vmatmul.f32.gmra.mxu0 %v771
        %v790 = vpop.f32.mrf.mxu0
        %v791 = vadd.f32 0.0, %v790
        %792 = vdwg.mxu0
        %v793 = vld [vmem:[%s3] sm:$0xff]
        %v794 = vld [vmem:[%s3 + $0x8] sm:$0xff]
        %v795 = vld [vmem:[%s3 + $0x10] sm:$0xff]
        %v796 = vld [vmem:[%s3 + $0x18] sm:$0xff]
        %v797 = vld [vmem:[%s4] sm:$0x1]
        %vm798 = vcmask 261120
        %v800 = vsel %vm798, %v791, 0
        %802 = vmatpush.msra.mxu0 0.0
        %803 = vmatpush.msra.mxu0 0.0
        %804 = vmatpush.msra.mxu0 0.0
        %805 = vmatpush.msra.mxu0 0.0
        %806 = vmatpush.msra.mxu0 0.0
        %807 = vmatpush.msra.mxu0 0.0
        %808 = vmatpush.msra.mxu0 0.0
        %809 = vmatpush.msra.mxu0 0.0
        %810 = vmatpush.msra.mxu0 0.0
        %811 = vmatpush.msra.mxu0 0.0
        %812 = vmatpush.msra.mxu0 0.0
        %813 = vmatpush.msra.mxu0 0.0
        %814 = vmatpush.msra.mxu0 %v796
        %815 = vmatpush.msra.mxu0 %v795
        %816 = vmatpush.msra.mxu0 %v794
        %817 = vmatpush.msra.mxu0 %v793
        %818 = vmatmul.f32.gmra.mxu0 %v800
        %v819 = vpop.f32.mrf.mxu0
        %v820 = vadd.f32 %v797, %v819
        %821 = vdwg.mxu0
        %vm822 = vcmask 122880
        %v823 = vsel %vm822, %v820, -inf
        %824 = vmax.xlane.f32.xlu0 %v823
        %v825 = vpop.xlane.xlu0 %824
        %v826 = vsub.f32 %v820, %v825
        %v827 = vmul.f32 %v826, 1.442695
        %v828 = vpow.pop %v827
        %v829 = vsel %vm822, %v828, 0.0
        %830 = vadd.xlane.f32.xlu0 %v829
        %v831 = vpop.xlane.xlu0 %830
        %v832 = vrcp.pop %v831
        %v833 = vmul.f32 %v828, %v832
        %834 = vst.msk [vmem:[%s707] sm:$0x1] %vm822, %v833
        %v835 = vld [vmem:[%s5] sm:$0xff]
        %v836 = vld [vmem:[%s5 + $0x8] sm:$0xff]
        %v837 = vld [vmem:[%s5 + $0x10] sm:$0xff]
        %v838 = vld [vmem:[%s5 + $0x18] sm:$0xff]
        %v839 = vld [vmem:[%s6] sm:$0x1]
        %v841 = vperm.slane %v839, 0
        %v844 = vsel %vm798, %v767, 0
        %v847 = vsel %vm798, %v768, 0
        %849 = vmatpush.msra.mxu0 0.0
        %850 = vmatpush.msra.mxu0 0.0
        %851 = vmatpush.msra.mxu0 0.0
        %852 = vmatpush.msra.mxu0 0.0
        %853 = vmatpush.msra.mxu0 0.0
        %854 = vmatpush.msra.mxu0 0.0
        %855 = vmatpush.msra.mxu0 0.0
        %856 = vmatpush.msra.mxu0 0.0
        %857 = vmatpush.msra.mxu0 0.0
        %858 = vmatpush.msra.mxu0 0.0
        %859 = vmatpush.msra.mxu0 0.0
        %860 = vmatpush.msra.mxu0 0.0
        %861 = vmatpush.msra.mxu0 %v838
        %862 = vmatpush.msra.mxu0 %v837
        %863 = vmatpush.msra.mxu0 %v836
        %864 = vmatpush.msra.mxu0 %v835
        %865 = vmatmul.f32.gmra.mxu0 %v844
        %v866 = vpop.f32.mrf.mxu0
        %v867 = vadd.f32 %v841, %v866
        %868 = vmatmul.f32.gmra.mxu0 %v847
        %v869 = vpop.f32.mrf.mxu0
        %v870 = vadd.f32 %v841, %v869
        %871 = vdwg.mxu0
        %v872 = vld [vmem:[%s7] sm:$0xff]
        %v873 = vld [vmem:[%s8] sm:$0xff]
        %v874 = vld [vmem:[%s8 + $0x8] sm:$0xff]
        %v875 = vld [vmem:[%s9] sm:$0x1]
        %v877 = vperm.slane %v875, 0
        %v880 = vsel %vm769, %v872, 0
        %882 = vmatpush.msra.mxu0 0.0
        %883 = vmatpush.msra.mxu0 0.0
        %884 = vmatpush.msra.mxu0 0.0
        %885 = vmatpush.msra.mxu0 0.0
        %886 = vmatpush.msra.mxu0 0.0
        %887 = vmatpush.msra.mxu0 0.0
        %888 = vmatpush.msra.mxu0 0.0
        %889 = vmatpush.msra.mxu0 0.0
        %890 = vmatpush.msra.mxu0 0.0
        %891 = vmatpush.msra.mxu0 0.0
        %892 = vmatpush.msra.mxu0 0.0
        %893 = vmatpush.msra.mxu0 0.0
        %894 = vmatpush.msra.mxu0 0.0
        %895 = vmatpush.msra.mxu0 0.0
        %896 = vmatpush.msra.mxu0 %v874
        %897 = vmatpush.msra.mxu0 %v873
        %898 = vmatmul.f32.gmra.mxu0 %v880
        %v899 = vpop.f32.mrf.mxu0
        %v900 = vadd.f32 %v877, %v899
        %901 = vdwg.mxu0
        %v903 = vsel %vm798, %v900, 0
        %v906 = vsel %vm798, %v867, 0
        %v909 = vsel %vm798, %v870, 0
        %911 = vmatpush.xpose.msra.mxu0 0.0
        %912 = vmatpush.xpose.msra.mxu0 0.0
        %913 = vmatpush.xpose.msra.mxu0 0.0
        %914 = vmatpush.xpose.msra.mxu0 0.0
        %915 = vmatpush.xpose.msra.mxu0 0.0
        %916 = vmatpush.xpose.msra.mxu0 0.0
        %917 = vmatpush.xpose.msra.mxu0 0.0
        %918 = vmatpush.xpose.msra.mxu0 0.0
        %919 = vmatpush.xpose.msra.mxu0 0.0
        %920 = vmatpush.xpose.msra.mxu0 0.0
        %921 = vmatpush.xpose.msra.mxu0 0.0
        %922 = vmatpush.xpose.msra.mxu0 0.0
        %923 = vmatpush.xpose.msra.mxu0 0.0
        %924 = vmatpush.xpose.msra.mxu0 0.0
        %925 = vmatpush.xpose.msra.mxu0 %v909
        %926 = vmatpush.xpose.msra.mxu0 %v906
        %927 = vmatmul.f32.gmra.mxu0 %v903
        %v928 = vpop.f32.mrf.mxu0
        %v929 = vadd.f32 0.0, %v928
        %930 = vdwg.mxu0
        %v931 = vsel %vm769, %v929, -inf
        %932 = vmax.xlane.f32.xlu0 %v931
        %v933 = vpop.xlane.xlu0 %932
        %v934 = vsub.f32 %v929, %v933
        %v935 = vmul.f32 %v934, 1.442695
        %v936 = vpow.pop %v935
        %v937 = vsel %vm769, %v936, 0.0
        %938 = vadd.xlane.f32.xlu0 %v937
        %v939 = vpop.xlane.xlu0 %938
        %v940 = vrcp.pop %v939
        %v941 = vmul.f32 %v936, %v940
        %942 = vst.msk [vmem:[%s714] sm:$0xff] %vm769, %v941
        %v944 = vsel %vm769, %v941, 0
        %946 = vmatpush.msra.mxu0 0.0
        %947 = vmatpush.msra.mxu0 0.0
        %948 = vmatpush.msra.mxu0 0.0
        %949 = vmatpush.msra.mxu0 0.0
        %950 = vmatpush.msra.mxu0 0.0
        %951 = vmatpush.msra.mxu0 0.0
        %952 = vmatpush.msra.mxu0 0.0
        %953 = vmatpush.msra.mxu0 0.0
        %954 = vmatpush.msra.mxu0 0.0
        %955 = vmatpush.msra.mxu0 0.0
        %956 = vmatpush.msra.mxu0 0.0
        %957 = vmatpush.msra.mxu0 0.0
        %958 = vmatpush.msra.mxu0 0.0
        %959 = vmatpush.msra.mxu0 0.0
        %960 = vmatpush.msra.mxu0 %v768
        %961 = vmatpush.msra.mxu0 %v767
        %962 = vmatmul.f32.gmra.mxu0 %v944
        %v963 = vpop.f32.mrf.mxu0
        %v964 = vadd.f32 0.0, %v963
        %965 = vdwg.mxu0
        %v966 = vld [vmem:[%s10] sm:$0xff]
        %v967 = vld [vmem:[%s10 + $0x8] sm:$0xff]
        %v968 = vld [vmem:[%s10 + $0x10] sm:$0xff]
        %v969 = vld [vmem:[%s10 + $0x18] sm:$0xff]
        %v970 = vld [vmem:[%s11] sm:$0x1]
        %v972 = vperm.slane %v970, 0
        %v975 = vsel %vm798, %v964, 0
        %977 = vmatpush.msra.mxu0 0.0
        %978 = vmatpush.msra.mxu0 0.0
        %979 = vmatpush.msra.mxu0 0.0
        %980 = vmatpush.msra.mxu0 0.0
        %981 = vmatpush.msra.mxu0 0.0
        %982 = vmatpush.msra.mxu0 0.0
        %983 = vmatpush.msra.mxu0 0.0
        %984 = vmatpush.msra.mxu0 0.0
        %985 = vmatpush.msra.mxu0 0.0
        %986 = vmatpush.msra.mxu0 0.0
        %987 = vmatpush.msra.mxu0 0.0
        %988 = vmatpush.msra.mxu0 0.0
        %989 = vmatpush.msra.mxu0 %v969
        %990 = vmatpush.msra.mxu0 %v968
        %991 = vmatpush.msra.mxu0 %v967
        %992 = vmatpush.msra.mxu0 %v966
        %993 = vmatmul.f32.gmra.mxu0 %v975
        %v994 = vpop.f32.mrf.mxu0
        %v995 = vadd.f32 %v972, %v994
        %996 = vdwg.mxu0
        %v997 = vmax.f32 %v995, 0.0
        %v998 = vld [vmem:[%s12] sm:$0xff]
        %v999 = vld [vmem:[%s12 + $0x8] sm:$0xff]
        %v1000 = vld [vmem:[%s12 + $0x10] sm:$0xff]
        %v1001 = vld [vmem:[%s12 + $0x18] sm:$0xff]
        %v1002 = vld [vmem:[%s13] sm:$0x1]
        %v1004 = vperm.slane %v1002, 0
        %v1007 = vsel %vm798, %v997, 0
        %1009 = vmatpush.msra.mxu0 0.0
        %1010 = vmatpush.msra.mxu0 0.0
        %1011 = vmatpush.msra.mxu0 0.0
        %1012 = vmatpush.msra.mxu0 0.0
        %1013 = vmatpush.msra.mxu0 0.0
        %1014 = vmatpush.msra.mxu0 0.0
        %1015 = vmatpush.msra.mxu0 0.0
        %1016 = vmatpush.msra.mxu0 0.0
        %1017 = vmatpush.msra.mxu0 0.0
        %1018 = vmatpush.msra.mxu0 0.0
        %1019 = vmatpush.msra.mxu0 0.0
        %1020 = vmatpush.msra.mxu0 0.0
        %1021 = vmatpush.msra.mxu0 %v1001
        %1022 = vmatpush.msra.mxu0 %v1000
        %1023 = vmatpush.msra.mxu0 %v999
        %1024 = vmatpush.msra.mxu0 %v998
        %1025 = vmatmul.f32.gmra.mxu0 %v1007
        %v1026 = vpop.f32.mrf.mxu0
        %v1027 = vadd.f32 %v1004, %v1026
        %1028 = vdwg.mxu0
        %v1029 = vld [vmem:[%s14] sm:$0xff]
        %v1030 = vld [vmem:[%s15] sm:$0xff]
        %v1031 = vld [vmem:[%s15 + $0x8] sm:$0xff]
        %v1032 = vld [vmem:[%s15 + $0x10] sm:$0xff]
        %v1033 = vld [vmem:[%s15 + $0x18] sm:$0xff]
        %v1034 = vld [vmem:[%s15 + $0x20] sm:$0xff]
        %v1035 = vld [vmem:[%s15 + $0x28] sm:$0xff]
        %v1036 = vld [vmem:[%s15 + $0x30] sm:$0xff]
        %v1037 = vld [vmem:[%s15 + $0x38] sm:$0xff]
        %v1038 = vld [vmem:[%s16] sm:$0xf]
        %vm1039 = vcmask 64512
        %v1041 = vsel %vm1039, %v1029, 0
        %1043 = vmatpush.msra.mxu0 0.0
        %1044 = vmatpush.msra.mxu0 0.0
        %1045 = vmatpush.msra.mxu0 0.0
        %1046 = vmatpush.msra.mxu0 0.0
        %1047 = vmatpush.msra.mxu0 0.0
        %1048 = vmatpush.msra.mxu0 0.0
        %1049 = vmatpush.msra.mxu0 0.0
        %1050 = vmatpush.msra.mxu0 0.0
        %1051 = vmatpush.msra.mxu0 0.0
        %1052 = vmatpush.msra.mxu0 0.0
        %1053 = vmatpush.msra.mxu0 0.0
        %1054 = vmatpush.msra.mxu0 0.0
        %1055 = vmatpush.msra.mxu0 0.0
        %1056 = vmatpush.msra.mxu0 0.0
        %1057 = vmatpush.msra.mxu0 0.0
        %1058 = vmatpush.msra.mxu0 %v1027
        %1059 = vmatmul.f32.gmra.mxu0 %v1041
        %v1060 = vpop.f32.mrf.mxu0
        %v1061 = vadd.f32 0.0, %v1060
        %1062 = vdwg.mxu0
        %v1063 = vtanh.pop %v1061
        %1065 = vrot.lane.b32.xlu0 %v1027, 8
        %v1066 = vpop.permute.xlu0 %1065
        %v1068 = vsel %vm1039, %v1063, %v1066
        %v1070 = vperm.slane %v1038, 0
        %v1071 = vperm.slane %v1038, 1
        %v1072 = vperm.slane %v1038, 2
        %v1073 = vperm.slane %v1038, 3
        %v1079 = vsel %vm769, %v1068, 0
        %1081 = vmatpush.msra.mxu0 0.0
        %1082 = vmatpush.msra.mxu0 0.0
        %1083 = vmatpush.msra.mxu0 0.0
        %1084 = vmatpush.msra.mxu0 0.0
        %1085 = vmatpush.msra.mxu0 0.0
        %1086 = vmatpush.msra.mxu0 0.0
        %1087 = vmatpush.msra.mxu0 0.0
        %1088 = vmatpush.msra.mxu0 0.0
        %1089 = vmatpush.msra.mxu0 0.0
        %1090 = vmatpush.msra.mxu0 0.0
        %1091 = vmatpush.msra.mxu0 0.0
        %1092 = vmatpush.msra.mxu0 0.0
        %1093 = vmatpush.msra.mxu0 0.0
        %1094 = vmatpush.msra.mxu0 0.0
        %1095 = vmatpush.msra.mxu0 %v1034
        %1096 = vmatpush.msra.mxu0 %v1030
        %1097 = vmatmul.f32.gmra.mxu0 %v1079
        %v1098 = vpop.f32.mrf.mxu0
        %v1099 = vadd.f32 %v1070, %v1098
        %1100 = vdwg.mxu0
        %1101 = vmatpush.msra.mxu0 0.0
        %1102 = vmatpush.msra.mxu0 0.0
        %1103 = vmatpush.msra.mxu0 0.0
        %1104 = vmatpush.msra.mxu0 0.0
        %1105 = vmatpush.msra.mxu0 0.0
        %1106 = vmatpush.msra.mxu0 0.0
        %1107 = vmatpush.msra.mxu0 0.0
        %1108 = vmatpush.msra.mxu0 0.0
        %1109 = vmatpush.msra.mxu0 0.0
        %1110 = vmatpush.msra.mxu0 0.0
        %1111 = vmatpush.msra.mxu0 0.0
        %1112 = vmatpush.msra.mxu0 0.0
        %1113 = vmatpush.msra.mxu0 0.0
        %1114 = vmatpush.msra.mxu0 0.0
        %1115 = vmatpush.msra.mxu0 %v1035
        %1116 = vmatpush.msra.mxu0 %v1031
        %1117 = vmatmul.f32.gmra.mxu0 %v1079
        %v1118 = vpop.f32.mrf.mxu0
        %v1119 = vadd.f32 %v1071, %v1118
        %1120 = vdwg.mxu0
        %1121 = vmatpush.msra.mxu0 0.0
        %1122 = vmatpush.msra.mxu0 0.0
        %1123 = vmatpush.msra.mxu0 0.0
        %1124 = vmatpush.msra.mxu0 0.0
        %1125 = vmatpush.msra.mxu0 0.0
        %1126 = vmatpush.msra.mxu0 0.0
        %1127 = vmatpush.msra.mxu0 0.0
        %1128 = vmatpush.msra.mxu0 0.0
        %1129 = vmatpush.msra.mxu0 0.0
        %1130 = vmatpush.msra.mxu0 0.0
        %1131 = vmatpush.msra.mxu0 0.0
        %1132 = vmatpush.msra.mxu0 0.0
        %1133 = vmatpush.msra.mxu0 0.0
        %1134 = vmatpush.msra.mxu0 0.0
        %1135 = vmatpush.msra.mxu0 %v1036
        %1136 = vmatpush.msra.mxu0 %v1032
        %1137 = vmatmul.f32.gmra.mxu0 %v1079
        %v1138 = vpop.f32.mrf.mxu0
        %v1139 = vadd.f32 %v1072, %v1138
        %1140 = vdwg.mxu0
        %1141 = vmatpush.msra.mxu0 0.0
        %1142 = vmatpush.msra.mxu0 0.0
        %1143 = vmatpush.msra.mxu0 0.0
        %1144 = vmatpush.msra.mxu0 0.0
        %1145 = vmatpush.msra.mxu0 0.0
        %1146 = vmatpush.msra.mxu0 0.0
        %1147 = vmatpush.msra.mxu0 0.0
        %1148 = vmatpush.msra.mxu0 0.0
        %1149 = vmatpush.msra.mxu0 0.0
        %1150 = vmatpush.msra.mxu0 0.0
        %1151 = vmatpush.msra.mxu0 0.0
        %1152 = vmatpush.msra.mxu0 0.0
        %1153 = vmatpush.msra.mxu0 0.0
        %1154 = vmatpush.msra.mxu0 0.0
        %1155 = vmatpush.msra.mxu0 %v1037
        %1156 = vmatpush.msra.mxu0 %v1033
        %1157 = vmatmul.f32.gmra.mxu0 %v1079
        %v1158 = vpop.f32.mrf.mxu0
        %v1159 = vadd.f32 %v1073, %v1158
        %1160 = vdwg.mxu0
        %v1161 = vxor.u32 %v1099, 2147483648
        %v1162 = vmul.f32 %v1161, 1.442695
        %v1163 = vpow.pop %v1162
        %v1164 = vadd.f32 %v1163, 1.0
        %v1165 = vrcp.pop %v1164
        %v1166 = vmul.f32 %v1164, %v1165
        %v1167 = vsub.f32 1.0, %v1166
        %v1168 = vmul.f32 %v1165, %v1167
        %v1169 = vadd.f32 %v1165, %v1168
        %vm1170 = vweird.f32 %v1164
        %vm1171 = vweird.f32 %v1165
        %vm1172 = vmor %vm1170, %vm1171
        %v1173 = vsel %vm1172, %v1165, %v1169
        %v1174 = vand.u32 2147483647, %v1164
        %vm1175 = vcmp.eq.f32.partialorder %v1174, 8.507059e+37
        %v1176 = vand.u32 %v1164, 2147483648
        %v1177 = vor.u32 1.1754944e-38, %v1176
        %v1178 = vsel %vm1175, %v1177, %v1173
        %v1179 = vmul.f32 1.0, %v1178
        %v1180 = vxor.u32 %v1119, 2147483648
        %v1181 = vmul.f32 %v1180, 1.442695
        %v1182 = vpow.pop %v1181
        %v1183 = vadd.f32 %v1182, 1.0
        %v1184 = vrcp.pop %v1183
        %v1185 = vmul.f32 %v1183, %v1184
        %v1186 = vsub.f32 1.0, %v1185
        %v1187 = vmul.f32 %v1184, %v1186
        %v1188 = vadd.f32 %v1184, %v1187
        %vm1189 = vweird.f32 %v1183
        %vm1190 = vweird.f32 %v1184
        %vm1191 = vmor %vm1189, %vm1190
        %v1192 = vsel %vm1191, %v1184, %v1188
        %v1193 = vand.u32 2147483647, %v1183
        %vm1194 = vcmp.eq.f32.partialorder %v1193, 8.507059e+37
        %v1195 = vand.u32 %v1183, 2147483648
        %v1196 = vor.u32 1.1754944e-38, %v1195
        %v1197 = vsel %vm1194, %v1196, %v1192
        %v1198 = vmul.f32 1.0, %v1197
        %v1199 = vmul.f32 %v1179, %v1159
        %v1200 = vadd.f32 %v1139, %v1199
        %v1201 = vtanh.pop %v1200
        %v1202 = vsub.f32 1.0, %v1198
        %v1203 = vmul.f32 %v1202, %v1201
        %v1204 = vmul.f32 %v1198, %v1027
        %v1205 = vadd.f32 %v1203, %v1204
        %1206 = vmatpush.msra.mxu0 0.0
        %1207 = vmatpush.msra.mxu0 0.0
        %1208 = vmatpush.msra.mxu0 0.0
        %1209 = vmatpush.msra.mxu0 0.0
        %1210 = vmatpush.msra.mxu0 0.0
        %1211 = vmatpush.msra.mxu0 0.0
        %1212 = vmatpush.msra.mxu0 0.0
        %1213 = vmatpush.msra.mxu0 0.0
        %1214 = vmatpush.msra.mxu0 0.0
        %1215 = vmatpush.msra.mxu0 0.0
        %1216 = vmatpush.msra.mxu0 0.0
        %1217 = vmatpush.msra.mxu0 0.0
        %1218 = vmatpush.msra.mxu0 0.0
        %1219 = vmatpush.msra.mxu0 0.0
        %1220 = vmatpush.msra.mxu0 0.0
        %1221 = vmatpush.msra.mxu0 %v1205
        %1222 = vmatmul.f32.gmra.mxu0 %v1041
        %v1223 = vpop.f32.mrf.mxu0
        %v1224 = vadd.f32 0.0, %v1223
        %1225 = vdwg.mxu0
        %v1226 = vtanh.pop %v1224
        %1228 = vrot.lane.b32.xlu0 %v1205, 8
        %v1229 = vpop.permute.xlu0 %1228
        %v1231 = vsel %vm1039, %v1226, %v1229
        %v1233 = vsel %vm769, %v1231, 0
        %1235 = vmatpush.msra.mxu0 0.0
        %1236 = vmatpush.msra.mxu0 0.0
        %1237 = vmatpush.msra.mxu0 0.0
        %1238 = vmatpush.msra.mxu0 0.0
        %1239 = vmatpush.msra.mxu0 0.0
        %1240 = vmatpush.msra.mxu0 0.0
        %1241 = vmatpush.msra.mxu0 0.0
        %1242 = vmatpush.msra.mxu0 0.0
        %1243 = vmatpush.msra.mxu0 0.0
        %1244 = vmatpush.msra.mxu0 0.0
        %1245 = vmatpush.msra.mxu0 0.0
        %1246 = vmatpush.msra.mxu0 0.0
        %1247 = vmatpush.msra.mxu0 0.0
        %1248 = vmatpush.msra.mxu0 0.0
        %1249 = vmatpush.msra.mxu0 %v1034
        %1250 = vmatpush.msra.mxu0 %v1030
        %1251 = vmatmul.f32.gmra.mxu0 %v1233
        %v1252 = vpop.f32.mrf.mxu0
        %v1253 = vadd.f32 %v1070, %v1252
        %1254 = vdwg.mxu0
        %1255 = vmatpush.msra.mxu0 0.0
        %1256 = vmatpush.msra.mxu0 0.0
        %1257 = vmatpush.msra.mxu0 0.0
        %1258 = vmatpush.msra.mxu0 0.0
        %1259 = vmatpush.msra.mxu0 0.0
        %1260 = vmatpush.msra.mxu0 0.0
        %1261 = vmatpush.msra.mxu0 0.0
        %1262 = vmatpush.msra.mxu0 0.0
        %1263 = vmatpush.msra.mxu0 0.0
        %1264 = vmatpush.msra.mxu0 0.0
        %1265 = vmatpush.msra.mxu0 0.0
        %1266 = vmatpush.msra.mxu0 0.0
        %1267 = vmatpush.msra.mxu0 0.0
        %1268 = vmatpush.msra.mxu0 0.0
        %1269 = vmatpush.msra.mxu0 %v1035
        %1270 = vmatpush.msra.mxu0 %v1031
        %1271 = vmatmul.f32.gmra.mxu0 %v1233
        %v1272 = vpop.f32.mrf.mxu0
        %v1273 = vadd.f32 %v1071, %v1272
        %1274 = vdwg.mxu0
        %1275 = vmatpush.msra.mxu0 0.0
        %1276 = vmatpush.msra.mxu0 0.0
        %1277 = vmatpush.msra.mxu0 0.0
        %1278 = vmatpush.msra.mxu0 0.0
        %1279 = vmatpush.msra.mxu0 0.0
        %1280 = vmatpush.msra.mxu0 0.0
        %1281 = vmatpush.msra.mxu0 0.0
        %1282 = vmatpush.msra.mxu0 0.0
        %1283 = vmatpush.msra.mxu0 0.0
        %1284 = vmatpush.msra.mxu0 0.0
        %1285 = vmatpush.msra.mxu0 0.0
        %1286 = vmatpush.msra.mxu0 0.0
        %1287 = vmatpush.msra.mxu0 0.0
        %1288 = vmatpush.msra.mxu0 0.0
        %1289 = vmatpush.msra.mxu0 %v1036
        %1290 = vmatpush.msra.mxu0 %v1032
        %1291 = vmatmul.f32.gmra.mxu0 %v1233
        %v1292 = vpop.f32.mrf.mxu0
        %v1293 = vadd.f32 %v1072, %v1292
        %1294 = vdwg.mxu0
        %1295 = vmatpush.msra.mxu0 0.0
        %1296 = vmatpush.msra.mxu0 0.0
        %1297 = vmatpush.msra.mxu0 0.0
        %1298 = vmatpush.msra.mxu0 0.0
        %1299 = vmatpush.msra.mxu0 0.0
        %1300 = vmatpush.msra.mxu0 0.0
        %1301 = vmatpush.msra.mxu0 0.0
        %1302 = vmatpush.msra.mxu0 0.0
        %1303 = vmatpush.msra.mxu0 0.0
        %1304 = vmatpush.msra.mxu0 0.0
        %1305 = vmatpush.msra.mxu0 0.0
        %1306 = vmatpush.msra.mxu0 0.0
        %1307 = vmatpush.msra.mxu0 0.0
        %1308 = vmatpush.msra.mxu0 0.0
        %1309 = vmatpush.msra.mxu0 %v1037
        %1310 = vmatpush.msra.mxu0 %v1033
        %1311 = vmatmul.f32.gmra.mxu0 %v1233
        %v1312 = vpop.f32.mrf.mxu0
        %v1313 = vadd.f32 %v1073, %v1312
        %1314 = vdwg.mxu0
        %v1315 = vxor.u32 %v1253, 2147483648
        %v1316 = vmul.f32 %v1315, 1.442695
        %v1317 = vpow.pop %v1316
        %v1318 = vadd.f32 %v1317, 1.0
        %v1319 = vrcp.pop %v1318
        %v1320 = vmul.f32 %v1318, %v1319
        %v1321 = vsub.f32 1.0, %v1320
        %v1322 = vmul.f32 %v1319, %v1321
        %v1323 = vadd.f32 %v1319, %v1322
        %vm1324 = vweird.f32 %v1318
        %vm1325 = vweird.f32 %v1319
        %vm1326 = vmor %vm1324, %vm1325
        %v1327 = vsel %vm1326, %v1319, %v1323
        %v1328 = vand.u32 2147483647, %v1318
        %vm1329 = vcmp.eq.f32.partialorder %v1328, 8.507059e+37
        %v1330 = vand.u32 %v1318, 2147483648
        %v1331 = vor.u32 1.1754944e-38, %v1330
        %v1332 = vsel %vm1329, %v1331, %v1327
        %v1333 = vmul.f32 1.0, %v1332
        %v1334 = vxor.u32 %v1273, 2147483648
        %v1335 = vmul.f32 %v1334, 1.442695
        %v1336 = vpow.pop %v1335
        %v1337 = vadd.f32 %v1336, 1.0
        %v1338 = vrcp.pop %v1337
        %v1339 = vmul.f32 %v1337, %v1338
        %v1340 = vsub.f32 1.0, %v1339
        %v1341 = vmul.f32 %v1338, %v1340
        %v1342 = vadd.f32 %v1338, %v1341
        %vm1343 = vweird.f32 %v1337
        %vm1344 = vweird.f32 %v1338
        %vm1345 = vmor %vm1343, %vm1344
        %v1346 = vsel %vm1345, %v1338, %v1342
        %v1347 = vand.u32 2147483647, %v1337
        %vm1348 = vcmp.eq.f32.partialorder %v1347, 8.507059e+37
        %v1349 = vand.u32 %v1337, 2147483648
        %v1350 = vor.u32 1.1754944e-38, %v1349
        %v1351 = vsel %vm1348, %v1350, %v1346
        %v1352 = vmul.f32 1.0, %v1351
        %v1353 = vmul.f32 %v1333, %v1313
        %v1354 = vadd.f32 %v1293, %v1353
        %v1355 = vtanh.pop %v1354
        %v1356 = vsub.f32 1.0, %v1352
        %v1357 = vmul.f32 %v1356, %v1355
        %v1358 = vmul.f32 %v1352, %v1205
        %v1359 = vadd.f32 %v1357, %v1358
        %1360 = vmatpush.msra.mxu0 0.0
        %1361 = vmatpush.msra.mxu0 0.0
        %1362 = vmatpush.msra.mxu0 0.0
        %1363 = vmatpush.msra.mxu0 0.0
        %1364 = vmatpush.msra.mxu0 0.0
        %1365 = vmatpush.msra.mxu0 0.0
        %1366 = vmatpush.msra.mxu0 0.0
        %1367 = vmatpush.msra.mxu0 0.0
        %1368 = vmatpush.msra.mxu0 0.0
        %1369 = vmatpush.msra.mxu0 0.0
        %1370 = vmatpush.msra.mxu0 0.0
        %1371 = vmatpush.msra.mxu0 0.0
        %1372 = vmatpush.msra.mxu0 0.0
        %1373 = vmatpush.msra.mxu0 0.0
        %1374 = vmatpush.msra.mxu0 0.0
        %1375 = vmatpush.msra.mxu0 %v1359
        %1376 = vmatmul.f32.gmra.mxu0 %v1041
        %v1377 = vpop.f32.mrf.mxu0
        %v1378 = vadd.f32 0.0, %v1377
        %1379 = vdwg.mxu0
        %v1380 = vtanh.pop %v1378
        %1382 = vrot.lane.b32.xlu0 %v1359, 8
        %v1383 = vpop.permute.xlu0 %1382
        %v1385 = vsel %vm1039, %v1380, %v1383
        %v1387 = vsel %vm769, %v1385, 0
        %1389 = vmatpush.msra.mxu0 0.0
        %1390 = vmatpush.msra.mxu0 0.0
        %1391 = vmatpush.msra.mxu0 0.0
        %1392 = vmatpush.msra.mxu0 0.0
        %1393 = vmatpush.msra.mxu0 0.0
        %1394 = vmatpush.msra.mxu0 0.0
        %1395 = vmatpush.msra.mxu0 0.0
        %1396 = vmatpush.msra.mxu0 0.0
        %1397 = vmatpush.msra.mxu0 0.0
        %1398 = vmatpush.msra.mxu0 0.0
        %1399 = vmatpush.msra.mxu0 0.0
        %1400 = vmatpush.msra.mxu0 0.0
        %1401 = vmatpush.msra.mxu0 0.0
        %1402 = vmatpush.msra.mxu0 0.0
        %1403 = vmatpush.msra.mxu0 %v1034
        %1404 = vmatpush.msra.mxu0 %v1030
        %1405 = vmatmul.f32.gmra.mxu0 %v1387
        %v1406 = vpop.f32.mrf.mxu0
        %v1407 = vadd.f32 %v1070, %v1406
        %1408 = vdwg.mxu0
        %1409 = vmatpush.msra.mxu0 0.0
        %1410 = vmatpush.msra.mxu0 0.0
        %1411 = vmatpush.msra.mxu0 0.0
        %1412 = vmatpush.msra.mxu0 0.0
        %1413 = vmatpush.msra.mxu0 0.0
        %1414 = vmatpush.msra.mxu0 0.0
        %1415 = vmatpush.msra.mxu0 0.0
        %1416 = vmatpush.msra.mxu0 0.0
        %1417 = vmatpush.msra.mxu0 0.0
        %1418 = vmatpush.msra.mxu0 0.0
        %1419 = vmatpush.msra.mxu0 0.0
        %1420 = vmatpush.msra.mxu0 0.0
        %1421 = vmatpush.msra.mxu0 0.0
        %1422 = vmatpush.msra.mxu0 0.0
        %1423 = vmatpush.msra.mxu0 %v1035
        %1424 = vmatpush.msra.mxu0 %v1031
        %1425 = vmatmul.f32.gmra.mxu0 %v1387
        %v1426 = vpop.f32.mrf.mxu0
        %v1427 = vadd.f32 %v1071, %v1426
        %1428 = vdwg.mxu0
        %1429 = vmatpush.msra.mxu0 0.0
        %1430 = vmatpush.msra.mxu0 0.0
        %1431 = vmatpush.msra.mxu0 0.0
        %1432 = vmatpush.msra.mxu0 0.0
        %1433 = vmatpush.msra.mxu0 0.0
        %1434 = vmatpush.msra.mxu0 0.0
        %1435 = vmatpush.msra.mxu0 0.0
        %1436 = vmatpush.msra.mxu0 0.0
        %1437 = vmatpush.msra.mxu0 0.0
        %1438 = vmatpush.msra.mxu0 0.0
        %1439 = vmatpush.msra.mxu0 0.0
        %1440 = vmatpush.msra.mxu0 0.0
        %1441 = vmatpush.msra.mxu0 0.0
        %1442 = vmatpush.msra.mxu0 0.0
        %1443 = vmatpush.msra.mxu0 %v1036
        %1444 = vmatpush.msra.mxu0 %v1032
        %1445 = vmatmul.f32.gmra.mxu0 %v1387
        %v1446 = vpop.f32.mrf.mxu0
        %v1447 = vadd.f32 %v1072, %v1446
        %1448 = vdwg.mxu0
        %1449 = vmatpush.msra.mxu0 0.0
        %1450 = vmatpush.msra.mxu0 0.0
        %1451 = vmatpush.msra.mxu0 0.0
        %1452 = vmatpush.msra.mxu0 0.0
        %1453 = vmatpush.msra.mxu0 0.0
        %1454 = vmatpush.msra.mxu0 0.0
        %1455 = vmatpush.msra.mxu0 0.0
        %1456 = vmatpush.msra.mxu0 0.0
        %1457 = vmatpush.msra.mxu0 0.0
        %1458 = vmatpush.msra.mxu0 0.0
        %1459 = vmatpush.msra.mxu0 0.0
        %1460 = vmatpush.msra.mxu0 0.0
        %1461 = vmatpush.msra.mxu0 0.0
        %1462 = vmatpush.msra.mxu0 0.0
        %1463 = vmatpush.msra.mxu0 %v1037
        %1464 = vmatpush.msra.mxu0 %v1033
        %1465 = vmatmul.f32.gmra.mxu0 %v1387
        %v1466 = vpop.f32.mrf.mxu0
        %v1467 = vadd.f32 %v1073, %v1466
        %1468 = vdwg.mxu0
        %v1469 = vxor.u32 %v1407, 2147483648
        %v1470 = vmul.f32 %v1469, 1.442695
        %v1471 = vpow.pop %v1470
        %v1472 = vadd.f32 %v1471, 1.0
        %v1473 = vrcp.pop %v1472
        %v1474 = vmul.f32 %v1472, %v1473
        %v1475 = vsub.f32 1.0, %v1474
        %v1476 = vmul.f32 %v1473, %v1475
        %v1477 = vadd.f32 %v1473, %v1476
        %vm1478 = vweird.f32 %v1472
        %vm1479 = vweird.f32 %v1473
        %vm1480 = vmor %vm1478, %vm1479
        %v1481 = vsel %vm1480, %v1473, %v1477
        %v1482 = vand.u32 2147483647, %v1472
        %vm1483 = vcmp.eq.f32.partialorder %v1482, 8.507059e+37
        %v1484 = vand.u32 %v1472, 2147483648
        %v1485 = vor.u32 1.1754944e-38, %v1484
        %v1486 = vsel %vm1483, %v1485, %v1481
        %v1487 = vmul.f32 1.0, %v1486
        %v1488 = vxor.u32 %v1427, 2147483648
        %v1489 = vmul.f32 %v1488, 1.442695
        %v1490 = vpow.pop %v1489
        %v1491 = vadd.f32 %v1490, 1.0
        %v1492 = vrcp.pop %v1491
        %v1493 = vmul.f32 %v1491, %v1492
        %v1494 = vsub.f32 1.0, %v1493
        %v1495 = vmul.f32 %v1492, %v1494
        %v1496 = vadd.f32 %v1492, %v1495
        %vm1497 = vweird.f32 %v1491
        %vm1498 = vweird.f32 %v1492
        %vm1499 = vmor %vm1497, %vm1498
        %v1500 = vsel %vm1499, %v1492, %v1496
        %v1501 = vand.u32 2147483647, %v1491
        %vm1502 = vcmp.eq.f32.partialorder %v1501, 8.507059e+37
        %v1503 = vand.u32 %v1491, 2147483648
        %v1504 = vor.u32 1.1754944e-38, %v1503
        %v1505 = vsel %vm1502, %v1504, %v1500
        %v1506 = vmul.f32 1.0, %v1505
        %v1507 = vmul.f32 %v1487, %v1467
        %v1508 = vadd.f32 %v1447, %v1507
        %v1509 = vtanh.pop %v1508
        %v1510 = vsub.f32 1.0, %v1506
        %v1511 = vmul.f32 %v1510, %v1509
        %v1512 = vmul.f32 %v1506, %v1359
        %v1513 = vadd.f32 %v1511, %v1512
        %1514 = vmatpush.msra.mxu0 0.0
        %1515 = vmatpush.msra.mxu0 0.0
        %1516 = vmatpush.msra.mxu0 0.0
        %1517 = vmatpush.msra.mxu0 0.0
        %1518 = vmatpush.msra.mxu0 0.0
        %1519 = vmatpush.msra.mxu0 0.0
        %1520 = vmatpush.msra.mxu0 0.0
        %1521 = vmatpush.msra.mxu0 0.0
        %1522 = vmatpush.msra.mxu0 0.0
        %1523 = vmatpush.msra.mxu0 0.0
        %1524 = vmatpush.msra.mxu0 0.0
        %1525 = vmatpush.msra.mxu0 0.0
        %1526 = vmatpush.msra.mxu0 0.0
        %1527 = vmatpush.msra.mxu0 0.0
        %1528 = vmatpush.msra.mxu0 0.0
        %1529 = vmatpush.msra.mxu0 %v1513
        %1530 = vmatmul.f32.gmra.mxu0 %v1041
        %v1531 = vpop.f32.mrf.mxu0
        %v1532 = vadd.f32 0.0, %v1531
        %1533 = vdwg.mxu0
        %v1534 = vtanh.pop %v1532
        %1536 = vrot.lane.b32.xlu0 %v1513, 8
        %v1537 = vpop.permute.xlu0 %1536
        %v1539 = vsel %vm1039, %v1534, %v1537
        %v1541 = vsel %vm769, %v1539, 0
        %1543 = vmatpush.msra.mxu0 0.0
        %1544 = vmatpush.msra.mxu0 0.0
        %1545 = vmatpush.msra.mxu0 0.0
        %1546 = vmatpush.msra.mxu0 0.0
        %1547 = vmatpush.msra.mxu0 0.0
        %1548 = vmatpush.msra.mxu0 0.0
        %1549 = vmatpush.msra.mxu0 0.0
        %1550 = vmatpush.msra.mxu0 0.0
        %1551 = vmatpush.msra.mxu0 0.0
        %1552 = vmatpush.msra.mxu0 0.0
        %1553 = vmatpush.msra.mxu0 0.0
        %1554 = vmatpush.msra.mxu0 0.0
        %1555 = vmatpush.msra.mxu0 0.0
        %1556 = vmatpush.msra.mxu0 0.0
        %1557 = vmatpush.msra.mxu0 %v1034
        %1558 = vmatpush.msra.mxu0 %v1030
        %1559 = vmatmul.f32.gmra.mxu0 %v1541
        %v1560 = vpop.f32.mrf.mxu0
        %v1561 = vadd.f32 %v1070, %v1560
        %1562 = vdwg.mxu0
        %1563 = vmatpush.msra.mxu0 0.0
        %1564 = vmatpush.msra.mxu0 0.0
        %1565 = vmatpush.msra.mxu0 0.0
        %1566 = vmatpush.msra.mxu0 0.0
        %1567 = vmatpush.msra.mxu0 0.0
        %1568 = vmatpush.msra.mxu0 0.0
        %1569 = vmatpush.msra.mxu0 0.0
        %1570 = vmatpush.msra.mxu0 0.0
        %1571 = vmatpush.msra.mxu0 0.0
        %1572 = vmatpush.msra.mxu0 0.0
        %1573 = vmatpush.msra.mxu0 0.0
        %1574 = vmatpush.msra.mxu0 0.0
        %1575 = vmatpush.msra.mxu0 0.0
        %1576 = vmatpush.msra.mxu0 0.0
        %1577 = vmatpush.msra.mxu0 %v1035
        %1578 = vmatpush.msra.mxu0 %v1031
        %1579 = vmatmul.f32.gmra.mxu0 %v1541
        %v1580 = vpop.f32.mrf.mxu0
        %v1581 = vadd.f32 %v1071, %v1580
        %1582 = vdwg.mxu0
        %1583 = vmatpush.msra.mxu0 0.0
        %1584 = vmatpush.msra.mxu0 0.0
        %1585 = vmatpush.msra.mxu0 0.0
        %1586 = vmatpush.msra.mxu0 0.0
        %1587 = vmatpush.msra.mxu0 0.0
        %1588 = vmatpush.msra.mxu0 0.0
        %1589 = vmatpush.msra.mxu0 0.0
        %1590 = vmatpush.msra.mxu0 0.0
        %1591 = vmatpush.msra.mxu0 0.0
        %1592 = vmatpush.msra.mxu0 0.0
        %1593 = vmatpush.msra.mxu0 0.0
        %1594 = vmatpush.msra.mxu0 0.0
        %1595 = vmatpush.msra.mxu0 0.0
        %1596 = vmatpush.msra.mxu0 0.0
        %1597 = vmatpush.msra.mxu0 %v1036
        %1598 = vmatpush.msra.mxu0 %v1032
        %1599 = vmatmul.f32.gmra.mxu0 %v1541
        %v1600 = vpop.f32.mrf.mxu0
        %v1601 = vadd.f32 %v1072, %v1600
        %1602 = vdwg.mxu0
        %1603 = vmatpush.msra.mxu0 0.0
        %1604 = vmatpush.msra.mxu0 0.0
        %1605 = vmatpush.msra.mxu0 0.0
        %1606 = vmatpush.msra.mxu0 0.0
        %1607 = vmatpush.msra.mxu0 0.0
        %1608 = vmatpush.msra.mxu0 0.0
        %1609 = vmatpush.msra.mxu0 0.0
        %1610 = vmatpush.msra.mxu0 0.0
        %1611 = vmatpush.msra.mxu0 0.0
        %1612 = vmatpush.msra.mxu0 0.0
        %1613 = vmatpush.msra.mxu0 0.0
        %1614 = vmatpush.msra.mxu0 0.0
        %1615 = vmatpush.msra.mxu0 0.0
        %1616 = vmatpush.msra.mxu0 0.0
        %1617 = vmatpush.msra.mxu0 %v1037
        %1618 = vmatpush.msra.mxu0 %v1033
        %1619 = vmatmul.f32.gmra.mxu0 %v1541
        %v1620 = vpop.f32.mrf.mxu0
        %v1621 = vadd.f32 %v1073, %v1620
        %1622 = vdwg.mxu0
        %v1623 = vxor.u32 %v1561, 2147483648
        %v1624 = vmul.f32 %v1623, 1.442695
        %v1625 = vpow.pop %v1624
        %v1626 = vadd.f32 %v1625, 1.0
        %v1627 = vrcp.pop %v1626
        %v1628 = vmul.f32 %v1626, %v1627
        %v1629 = vsub.f32 1.0, %v1628
        %v1630 = vmul.f32 %v1627, %v1629
        %v1631 = vadd.f32 %v1627, %v1630
        %vm1632 = vweird.f32 %v1626
        %vm1633 = vweird.f32 %v1627
        %vm1634 = vmor %vm1632, %vm1633
        %v1635 = vsel %vm1634, %v1627, %v1631
        %v1636 = vand.u32 2147483647, %v1626
        %vm1637 = vcmp.eq.f32.partialorder %v1636, 8.507059e+37
        %v1638 = vand.u32 %v1626, 2147483648
        %v1639 = vor.u32 1.1754944e-38, %v1638
        %v1640 = vsel %vm1637, %v1639, %v1635
        %v1641 = vmul.f32 1.0, %v1640
        %v1642 = vxor.u32 %v1581, 2147483648
        %v1643 = vmul.f32 %v1642, 1.442695
        %v1644 = vpow.pop %v1643
        %v1645 = vadd.f32 %v1644, 1.0
        %v1646 = vrcp.pop %v1645
        %v1647 = vmul.f32 %v1645, %v1646
        %v1648 = vsub.f32 1.0, %v1647
        %v1649 = vmul.f32 %v1646, %v1648
        %v1650 = vadd.f32 %v1646, %v1649
        %vm1651 = vweird.f32 %v1645
        %vm1652 = vweird.f32 %v1646
        %vm1653 = vmor %vm1651, %vm1652
        %v1654 = vsel %vm1653, %v1646, %v1650
        %v1655 = vand.u32 2147483647, %v1645
        %vm1656 = vcmp.eq.f32.partialorder %v1655, 8.507059e+37
        %v1657 = vand.u32 %v1645, 2147483648
        %v1658 = vor.u32 1.1754944e-38, %v1657
        %v1659 = vsel %vm1656, %v1658, %v1654
        %v1660 = vmul.f32 1.0, %v1659
        %v1661 = vmul.f32 %v1641, %v1621
        %v1662 = vadd.f32 %v1601, %v1661
        %v1663 = vtanh.pop %v1662
        %v1664 = vsub.f32 1.0, %v1660
        %v1665 = vmul.f32 %v1664, %v1663
        %v1666 = vmul.f32 %v1660, %v1513
        %v1667 = vadd.f32 %v1665, %v1666
        %1668 = vmatpush.msra.mxu0 0.0
        %1669 = vmatpush.msra.mxu0 0.0
        %1670 = vmatpush.msra.mxu0 0.0
        %1671 = vmatpush.msra.mxu0 0.0
        %1672 = vmatpush.msra.mxu0 0.0
        %1673 = vmatpush.msra.mxu0 0.0
        %1674 = vmatpush.msra.mxu0 0.0
        %1675 = vmatpush.msra.mxu0 0.0
        %1676 = vmatpush.msra.mxu0 0.0
        %1677 = vmatpush.msra.mxu0 0.0
        %1678 = vmatpush.msra.mxu0 0.0
        %1679 = vmatpush.msra.mxu0 0.0
        %1680 = vmatpush.msra.mxu0 0.0
        %1681 = vmatpush.msra.mxu0 0.0
        %1682 = vmatpush.msra.mxu0 0.0
        %1683 = vmatpush.msra.mxu0 %v1667
        %1684 = vmatmul.f32.gmra.mxu0 %v1041
        %v1685 = vpop.f32.mrf.mxu0
        %v1686 = vadd.f32 0.0, %v1685
        %1687 = vdwg.mxu0
        %v1688 = vtanh.pop %v1686
        %1690 = vrot.lane.b32.xlu0 %v1667, 8
        %v1691 = vpop.permute.xlu0 %1690
        %v1693 = vsel %vm1039, %v1688, %v1691
        %v1695 = vsel %vm769, %v1693, 0
        %1697 = vmatpush.msra.mxu0 0.0
        %1698 = vmatpush.msra.mxu0 0.0
        %1699 = vmatpush.msra.mxu0 0.0
        %1700 = vmatpush.msra.mxu0 0.0
        %1701 = vmatpush.msra.mxu0 0.0
        %1702 = vmatpush.msra.mxu0 0.0
        %1703 = vmatpush.msra.mxu0 0.0
        %1704 = vmatpush.msra.mxu0 0.0
        %1705 = vmatpush.msra.mxu0 0.0
        %1706 = vmatpush.msra.mxu0 0.0
        %1707 = vmatpush.msra.mxu0 0.0
        %1708 = vmatpush.msra.mxu0 0.0
        %1709 = vmatpush.msra.mxu0 0.0
        %1710 = vmatpush.msra.mxu0 0.0
        %1711 = vmatpush.msra.mxu0 %v1034
        %1712 = vmatpush.msra.mxu0 %v1030
        %1713 = vmatmul.f32.gmra.mxu0 %v1695
        %v1714 = vpop.f32.mrf.mxu0
        %v1715 = vadd.f32 %v1070, %v1714
        %1716 = vdwg.mxu0
        %1717 = vmatpush.msra.mxu0 0.0
        %1718 = vmatpush.msra.mxu0 0.0
        %1719 = vmatpush.msra.mxu0 0.0
        %1720 = vmatpush.msra.mxu0 0.0
        %1721 = vmatpush.msra.mxu0 0.0
        %1722 = vmatpush.msra.mxu0 0.0
        %1723 = vmatpush.msra.mxu0 0.0
        %1724 = vmatpush.msra.mxu0 0.0
        %1725 = vmatpush.msra.mxu0 0.0
        %1726 = vmatpush.msra.mxu0 0.0
        %1727 = vmatpush.msra.mxu0 0.0
        %1728 = vmatpush.msra.mxu0 0.0
        %1729 = vmatpush.msra.mxu0 0.0
        %1730 = vmatpush.msra.mxu0 0.0
        %1731 = vmatpush.msra.mxu0 %v1035
        %1732 = vmatpush.msra.mxu0 %v1031
        %1733 = vmatmul.f32.gmra.mxu0 %v1695
        %v1734 = vpop.f32.mrf.mxu0
        %v1735 = vadd.f32 %v1071, %v1734
        %1736 = vdwg.mxu0
        %1737 = vmatpush.msra.mxu0 0.0
        %1738 = vmatpush.msra.mxu0 0.0
        %1739 = vmatpush.msra.mxu0 0.0
        %1740 = vmatpush.msra.mxu0 0.0
        %1741 = vmatpush.msra.mxu0 0.0
        %1742 = vmatpush.msra.mxu0 0.0
        %1743 = vmatpush.msra.mxu0 0.0
        %1744 = vmatpush.msra.mxu0 0.0
        %1745 = vmatpush.msra.mxu0 0.0
        %1746 = vmatpush.msra.mxu0 0.0
        %1747 = vmatpush.msra.mxu0 0.0
        %1748 = vmatpush.msra.mxu0 0.0
        %1749 = vmatpush.msra.mxu0 0.0
        %1750 = vmatpush.msra.mxu0 0.0
        %1751 = vmatpush.msra.mxu0 %v1036
        %1752 = vmatpush.msra.mxu0 %v1032
        %1753 = vmatmul.f32.gmra.mxu0 %v1695
        %v1754 = vpop.f32.mrf.mxu0
        %v1755 = vadd.f32 %v1072, %v1754
        %1756 = vdwg.mxu0
        %1757 = vmatpush.msra.mxu0 0.0
        %1758 = vmatpush.msra.mxu0 0.0
        %1759 = vmatpush.msra.mxu0 0.0
        %1760 = vmatpush.msra.mxu0 0.0
        %1761 = vmatpush.msra.mxu0 0.0
        %1762 = vmatpush.msra.mxu0 0.0
        %1763 = vmatpush.msra.mxu0 0.0
        %1764 = vmatpush.msra.mxu0 0.0
        %1765 = vmatpush.msra.mxu0 0.0
        %1766 = vmatpush.msra.mxu0 0.0
        %1767 = vmatpush.msra.mxu0 0.0
        %1768 = vmatpush.msra.mxu0 0.0
        %1769 = vmatpush.msra.mxu0 0.0
        %1770 = vmatpush.msra.mxu0 0.0
        %1771 = vmatpush.msra.mxu0 %v1037
        %1772 = vmatpush.msra.mxu0 %v1033
        %1773 = vmatmul.f32.gmra.mxu0 %v1695
        %v1774 = vpop.f32.mrf.mxu0
        %v1775 = vadd.f32 %v1073, %v1774
        %1776 = vdwg.mxu0
        %v1777 = vxor.u32 %v1715, 2147483648
        %v1778 = vmul.f32 %v1777, 1.442695
        %v1779 = vpow.pop %v1778
        %v1780 = vadd.f32 %v1779, 1.0
        %v1781 = vrcp.pop %v1780
        %v1782 = vmul.f32 %v1780, %v1781
        %v1783 = vsub.f32 1.0, %v1782
        %v1784 = vmul.f32 %v1781, %v1783
        %v1785 = vadd.f32 %v1781, %v1784
        %vm1786 = vweird.f32 %v1780
        %vm1787 = vweird.f32 %v1781
        %vm1788 = vmor %vm1786, %vm1787
        %v1789 = vsel %vm1788, %v1781, %v1785
        %v1790 = vand.u32 2147483647, %v1780
        %vm1791 = vcmp.eq.f32.partialorder %v1790, 8.507059e+37
        %v1792 = vand.u32 %v1780, 2147483648
        %v1793 = vor.u32 1.1754944e-38, %v1792
        %v1794 = vsel %vm1791, %v1793, %v1789
        %v1795 = vmul.f32 1.0, %v1794
        %v1796 = vxor.u32 %v1735, 2147483648
        %v1797 = vmul.f32 %v1796, 1.442695
        %v1798 = vpow.pop %v1797
        %v1799 = vadd.f32 %v1798, 1.0
        %v1800 = vrcp.pop %v1799
        %v1801 = vmul.f32 %v1799, %v1800
        %v1802 = vsub.f32 1.0, %v1801
        %v1803 = vmul.f32 %v1800, %v1802
        %v1804 = vadd.f32 %v1800, %v1803
        %vm1805 = vweird.f32 %v1799
        %vm1806 = vweird.f32 %v1800
        %vm1807 = vmor %vm1805, %vm1806
        %v1808 = vsel %vm1807, %v1800, %v1804
        %v1809 = vand.u32 2147483647, %v1799
        %vm1810 = vcmp.eq.f32.partialorder %v1809, 8.507059e+37
        %v1811 = vand.u32 %v1799, 2147483648
        %v1812 = vor.u32 1.1754944e-38, %v1811
        %v1813 = vsel %vm1810, %v1812, %v1808
        %v1814 = vmul.f32 1.0, %v1813
        %v1815 = vmul.f32 %v1795, %v1775
        %v1816 = vadd.f32 %v1755, %v1815
        %v1817 = vtanh.pop %v1816
        %v1818 = vsub.f32 1.0, %v1814
        %v1819 = vmul.f32 %v1818, %v1817
        %v1820 = vmul.f32 %v1814, %v1667
        %v1821 = vadd.f32 %v1819, %v1820
        %v1822 = vld [vmem:[%s17] sm:$0xff]
        %v1823 = vld [vmem:[%s18] sm:$0x1]
        %v1825 = vperm.slane %v1823, 0
        %v1828 = vsel %vm1039, %v1821, 0
        %1830 = vmatpush.msra.mxu0 0.0
        %1831 = vmatpush.msra.mxu0 0.0
        %1832 = vmatpush.msra.mxu0 0.0
        %1833 = vmatpush.msra.mxu0 0.0
        %1834 = vmatpush.msra.mxu0 0.0
        %1835 = vmatpush.msra.mxu0 0.0
        %1836 = vmatpush.msra.mxu0 0.0
        %1837 = vmatpush.msra.mxu0 0.0
        %1838 = vmatpush.msra.mxu0 0.0
        %1839 = vmatpush.msra.mxu0 0.0
        %1840 = vmatpush.msra.mxu0 0.0
        %1841 = vmatpush.msra.mxu0 0.0
        %1842 = vmatpush.msra.mxu0 0.0
        %1843 = vmatpush.msra.mxu0 0.0
        %1844 = vmatpush.msra.mxu0 0.0
        %1845 = vmatpush.msra.mxu0 %v1822
        %1846 = vmatmul.f32.gmra.mxu0 %v1828
        %v1847 = vpop.f32.mrf.mxu0
        %v1848 = vadd.f32 %v1825, %v1847
        %1849 = vdwg.mxu0
        %v1850 = vmax.f32 %v1848, 0.0
        %v1851 = vld [vmem:[%s19] sm:$0x1]
        %s1852 = sld [smem:[#allocation2]]
        %v1853 = vstv %s1852
        %v1855 = vsel %vm798, %v1851, 0
        %v1858 = vsel %vm798, %v1850, 0
        %1860 = vmatpush.xpose.msra.mxu0 0.0
        %1861 = vmatpush.xpose.msra.mxu0 0.0
        %1862 = vmatpush.xpose.msra.mxu0 0.0
        %1863 = vmatpush.xpose.msra.mxu0 0.0
        %1864 = vmatpush.xpose.msra.mxu0 0.0
        %1865 = vmatpush.xpose.msra.mxu0 0.0
        %1866 = vmatpush.xpose.msra.mxu0 0.0
        %1867 = vmatpush.xpose.msra.mxu0 0.0
        %1868 = vmatpush.xpose.msra.mxu0 0.0
        %1869 = vmatpush.xpose.msra.mxu0 0.0
        %1870 = vmatpush.xpose.msra.mxu0 0.0
        %1871 = vmatpush.xpose.msra.mxu0 0.0
        %1872 = vmatpush.xpose.msra.mxu0 0.0
        %1873 = vmatpush.xpose.msra.mxu0 0.0
        %1874 = vmatpush.xpose.msra.mxu0 0.0
        %1875 = vmatpush.xpose.msra.mxu0 %v1858
        %1876 = vmatmul.f32.gmra.mxu0 %v1855
        %v1877 = vpop.f32.mrf.mxu0
        %v1878 = vadd.f32 %v1853, %v1877
        %1879 = vdwg.mxu0
        %vm1880 = vcmask 57344
        %1881 = vst.msk [vmem:[%s720] sm:$0x1] %vm1880, %v1878
        %s1882 = sand.u32 %s496, 1
        %s1883 = scalar_lea.sflag [#allocation4], %s1882
        %s1884 = sand.u32 %s496, 1
        %s1885 = scalar_lea.vmem [#allocation3], %s1884
        %s1886 = sand.u32 %s42, 1
        %s1887 = scalar_lea.sflag [#allocation6], %s1886
        %s1888 = sand.u32 %s522, 1
        %s1889 = smul.addr %s1888, 8
        %s1890 = scalar_lea.vmem [#allocation5], %s1889
        %s1891 = sand.u32 %s42, 1
        %s1892 = scalar_lea.sflag [#allocation6], %s1891
        %s1893 = sand.u32 %s548, 1
        %s1894 = scalar_lea.vmem [#allocation7], %s1893
        // Predicated region
        $region105: #{forward.1} parent=103 // pred_check
          %p1895 = pneg %p506
        $region106: #{forward.1} parent=103 // pred_check_branch
          %1897 = sbr.rel (%p1895) target = $region108
        $region107: #{forward.1} parent=103 // pred_region
          %1899 = vsyncadd %s1883, 0
          %s1900 = scalar_lea.hbm %s21, %s42
          %s1902 = sshll.u32 %s1885, 4
          %s1903 = int_to_ptr.vmem [resolvable:$true] %s1902
          %s1904 = sshll.u32 %s1900, 4
          %s1905 = int_to_ptr.hbm [resolvable:$true] %s1904
          %1907 = dma.vmem_to_hbm [thread:$0]  %s1903, 16, %s1905, %s1883
        $region108: #{forward.1} parent=103 // pred_fallthru
          _
        // Predicated region
        $region109: #{forward.1} parent=103 // pred_check
          %p1908 = pneg %p532
        $region110: #{forward.1} parent=103 // pred_check_branch
          %1910 = sbr.rel (%p1908) target = $region112
        $region111: #{forward.1} parent=103 // pred_region
          %1912 = vsyncadd %s1887, 0
          %s1913 = smul.addr %s42, 8
          %s1914 = scalar_lea.hbm %s22, %s1913
          %s1916 = sshll.u32 %s1890, 4
          %s1917 = int_to_ptr.vmem [resolvable:$true] %s1916
          %s1918 = sshll.u32 %s1914, 4
          %s1919 = int_to_ptr.hbm [resolvable:$true] %s1918
          %1921 = dma.vmem_to_hbm [thread:$0]  %s1917, 128, %s1919, %s1887
        $region112: #{forward.1} parent=103 // pred_fallthru
          _
        // Predicated region
        $region113: #{forward.1} parent=103 // pred_check
          %p1922 = pneg %p558
        $region114: #{forward.1} parent=103 // pred_check_branch
          %1924 = sbr.rel (%p1922) target = $region116
        $region115: #{forward.1} parent=103 // pred_region
          %1926 = vsyncadd %s1892, 0
          %s1927 = scalar_lea.hbm %s23, %s42
          %s1929 = sshll.u32 %s1894, 4
          %s1930 = int_to_ptr.vmem [resolvable:$true] %s1929
          %s1931 = sshll.u32 %s1927, 4
          %s1932 = int_to_ptr.hbm [resolvable:$true] %s1931
          %1934 = dma.vmem_to_hbm [thread:$0]  %s1930, 16, %s1932, %s1892
        $region116: #{forward.1} parent=103 // pred_fallthru
          _
      $region104: #{forward.1} parent=5 // pred_fallthru
        _
      %p1935 = scmp.le.s32.totalorder 2, %s37
      // Predicated region
      $region117: #{forward.1} parent=5 // pred_check
        %p1936 = pneg %p1935
      $region118: #{forward.1} parent=5 // pred_check_branch
        %1938 = sbr.rel (%p1936) target = $region120
      $region119: #{forward.1} parent=5 // pred_region
        %s1939 = ssub.s32 %s37, 2
        // Predicated region
        $region121: #{forward.1} parent=119 // pred_check
          %p1940 = pneg %p512
        $region122: #{forward.1} parent=119 // pred_check_branch
          %1942 = sbr.rel (%p1940) target = $region124
        $region123: #{forward.1} parent=119 // pred_region
          %s1943 = sand.u32 %s497, 1
          %s1944 = scalar_lea.sflag [#allocation4], %s1943
          %s1945 = sand.u32 %s497, 1
          %s1946 = scalar_lea.vmem [#allocation3], %s1945
          %1948 = dma.done %s1944, 16
        $region124: #{forward.1} parent=119 // pred_fallthru
          _
        // Predicated region
        $region125: #{forward.1} parent=119 // pred_check
          %p1949 = pneg %p538
        $region126: #{forward.1} parent=119 // pred_check_branch
          %1951 = sbr.rel (%p1949) target = $region128
        $region127: #{forward.1} parent=119 // pred_region
          %s1952 = sand.u32 %s43, 1
          %s1953 = scalar_lea.sflag [#allocation6], %s1952
          %s1954 = sand.u32 %s523, 1
          %s1955 = smul.addr %s1954, 8
          %s1956 = scalar_lea.vmem [#allocation5], %s1955
          %1958 = dma.done %s1953, 128
        $region128: #{forward.1} parent=119 // pred_fallthru
          _
        // Predicated region
        $region129: #{forward.1} parent=119 // pred_check
          %p1959 = pneg %p564
        $region130: #{forward.1} parent=119 // pred_check_branch
          %1961 = sbr.rel (%p1959) target = $region132
        $region131: #{forward.1} parent=119 // pred_region
          %s1962 = sand.u32 %s43, 1
          %s1963 = scalar_lea.sflag [#allocation6], %s1962
          %s1964 = sand.u32 %s549, 1
          %s1965 = scalar_lea.vmem [#allocation7], %s1964
          %1967 = dma.done %s1963, 16
        $region132: #{forward.1} parent=119 // pred_fallthru
          _
      $region120: #{forward.1} parent=5 // pred_fallthru
        _
    $region6: #{forward.1} parent=1 // loop_footer
      %s41 = sadd.s32 1, %s37
    $region7: #{forward.1} parent=1 // loop_footer_branch
      %36 = sbr.rel target = $region3
    $region8: #{forward.1} parent=1 // loop_exit
      _
    %1968 = vsyncpa [#allocation4], 1
    %s1969 = scalar_lea.sflag [#allocation4], 1
    %1970 = vsyncpa %s1969, 1
    %1971 = vsyncpa [#allocation6], 1
    %s1972 = scalar_lea.sflag [#allocation6], 1
    %1973 = vsyncpa %s1972, 1

</llo_original>
